<compile_context>
chip_gen: v5e
topology: v5e:2x2
jax: 0.10.0
libtpu: 0.0.40
codegen_flags: <defaults>
</compile_context>

<pallas_src>
import functools
from math import sqrt

import jax
import jax.numpy as jnp
from jax.experimental import pallas as pl
from jax.experimental.pallas import tpu as pltpu


def _layer_norm(x, gamma, beta, eps=1e-5):
    mean = jnp.mean(x, axis=-1, keepdims=True)
    var = jnp.mean(jnp.square(x - mean), axis=-1, keepdims=True)
    return (x - mean) * jax.lax.rsqrt(var + eps) * gamma + beta


def encoder_block_kernel(
    x_ref, ne_ref,
    g1_ref, bt1_ref, g2_ref, bt2_ref, wss_ref, bss_ref,   # conditional LayerNorms
    wqkv_ref, bqkv_ref, wo_ref, bo_ref,                   # MultiheadAttention
    wm1_ref, bm1_ref, wm2_ref, bm2_ref,                   # FeedForward
    o_ref,
    *, num_heads):
    Bt, S, D = x_ref.shape
    hd = D // num_heads
    R = Bt * S
    inv_sqrt_hd = 1.0 / sqrt(hd)

    x = x_ref[...].astype(jnp.float32)                    # (Bt, S, D)
    ne = ne_ref[:, 0, :].astype(jnp.float32)              # (Bt, Nd)

    # ---- fused ConditionalLayerNorm scale/shift projection (both blocks) ---
    ss = jnp.dot(ne, wss_ref[...], preferred_element_type=jnp.float32) + bss_ref[...]
    scale1 = jnp.clip(ss[:, :D], -0.9, 10.0)[:, None, :]           # (Bt, 1, D)
    shift1 = ss[:, D:2 * D][:, None, :]
    scale2 = jnp.clip(ss[:, 2 * D:3 * D], -0.9, 10.0)[:, None, :]
    shift2 = ss[:, 3 * D:][:, None, :]

    # ---- ConditionalLayerNorm 1 (f32 statistics) ----------------------------
    xn = _layer_norm(x, g1_ref[...], bt1_ref[...]) * (1.0 + scale1) + shift1

    # ---- Multi-head self-attention (eval mode: attn_drop = identity) --------
    qkv = jnp.dot(xn.reshape(R, D).astype(jnp.bfloat16), wqkv_ref[...],
                  preferred_element_type=jnp.float32) + bqkv_ref[...]   # (R, 3D)
    qkv = qkv.reshape(Bt, S, 3 * D)
    q = qkv[..., :D] * inv_sqrt_hd
    k = qkv[..., D:2 * D]
    v = qkv[..., 2 * D:]

    ctx_parts = []
    for h in range(num_heads):                  # static unroll; heads are few
        lo = h * hd
        qh = q[..., lo:lo + hd]                 # (Bt, S, hd)
        kh = k[..., lo:lo + hd]
        vh = v[..., lo:lo + hd]
        s = jnp.einsum('bqd,bkd->bqk', qh, kh,
                       preferred_element_type=jnp.float32)      # (Bt, S, S)
        s = s - jnp.max(s, axis=-1, keepdims=True)
        p = jnp.exp(s)                                          # f32 softmax
        p = p * pl.reciprocal(jnp.sum(p, axis=-1, keepdims=True), approx=True)
        ctx_parts.append(jnp.einsum('bqk,bkd->bqd', p, vh,
                                    preferred_element_type=jnp.float32))
    ctx = jnp.concatenate(ctx_parts, axis=-1)                   # (Bt, S, D)

    # single fused output projection over all heads (one K=D MXU pass)
    attn = jnp.dot(ctx.reshape(R, D).astype(jnp.bfloat16), wo_ref[...],
                   preferred_element_type=jnp.float32) + bo_ref[...]    # (R, D)
    x1 = x.reshape(R, D) + attn                                 # residual, f32

    # ---- ConditionalLayerNorm 2 + FeedForward --------------------------------
    x2n = (_layer_norm(x1.reshape(Bt, S, D), g2_ref[...], bt2_ref[...])
           * (1.0 + scale2) + shift2)
    h1 = jnp.dot(x2n.reshape(R, D).astype(jnp.bfloat16), wm1_ref[...],
                 preferred_element_type=jnp.float32) + bm1_ref[...]     # (R, H)
    h1 = jax.nn.gelu(h1, approximate=True)      # tanh GELU (see header TODO)
    mlp = jnp.dot(h1.astype(jnp.bfloat16), wm2_ref[...],
                  preferred_element_type=jnp.float32) + bm2_ref[...]    # (R, D)

    o_ref[...] = (x1 + mlp).reshape(Bt, S, D).astype(o_ref.dtype)


def _choose_batch_tile(B, S, target_rows=256, min_steps=4):
    """Largest divisor Bt of B with Bt*S <= target_rows while keeping at least
    min_steps grid steps whenever B allows it (pipelining / v7x's 2 TCs)."""
    best = 1
    for bt in range(1, B + 1):
        if B % bt:
            continue
        if bt * S > target_rows and bt > 1:
            continue
        if B // bt < min(min_steps, B):
            continue
        best = bt
    return best


def encoder_block(x, noise_embedding, params, *, num_heads):
    (g1, bt1, wss1, bss1, wqkv, bqkv, wo, bo,
     g2, bt2, wss2, bss2, wm1, bm1, wm2, bm2) = params
    B, S, D = x.shape
    Nd = noise_embedding.shape[-1]
    H = wm1.shape[1]
    assert D % num_heads == 0

    Bt = _choose_batch_tile(B, S)
    grid = (B // Bt,)

    # Fuse both CLN scale/shift projections into one (Nd, 4D) weight.
    wss_cat = jnp.concatenate([wss1, wss2], axis=1)
    bss_cat = jnp.concatenate([bss1, bss2], axis=1)

    # Keep the noise embedding's last two dims lane/sublane friendly.
    ne3 = noise_embedding.reshape(B, 1, Nd)

    kernel = functools.partial(encoder_block_kernel, num_heads=num_heads)
    const2 = lambda b: (0, 0)                    # weights stay VMEM-resident

    return pl.pallas_call(
        kernel,
        out_shape=jax.ShapeDtypeStruct((B, S, D), x.dtype),
        grid_spec=pltpu.PrefetchScalarGridSpec(
            num_scalar_prefetch=0,
            grid=grid,
            in_specs=[
                pl.BlockSpec((Bt, S, D), lambda b: (b, 0, 0)),    # x
                pl.BlockSpec((Bt, 1, Nd), lambda b: (b, 0, 0)),   # noise embedding
                pl.BlockSpec((1, D), const2),                     # gamma1
                pl.BlockSpec((1, D), const2),                     # beta1
                pl.BlockSpec((1, D), const2),                     # gamma2
                pl.BlockSpec((1, D), const2),                     # beta2
                pl.BlockSpec((Nd, 4 * D), const2),                # wss1|wss2
                pl.BlockSpec((1, 4 * D), const2),                 # bss1|bss2
                pl.BlockSpec((D, 3 * D), const2),                 # wqkv (q|k|v)
                pl.BlockSpec((1, 3 * D), const2),                 # bqkv
                pl.BlockSpec((D, D), const2),                     # wo
                pl.BlockSpec((1, D), const2),                     # bo
                pl.BlockSpec((D, H), const2),                     # mlp w1
                pl.BlockSpec((1, H), const2),                     # mlp b1
                pl.BlockSpec((H, D), const2),                     # mlp w2
                pl.BlockSpec((1, D), const2),                     # mlp b2
            ],
            out_specs=pl.BlockSpec((Bt, S, D), lambda b: (b, 0, 0)),
        ),
        compiler_params=pltpu.CompilerParams(
            dimension_semantics=("parallel",),
            vmem_limit_bytes=32 * 1024 * 1024),
    )(x, ne3, g1, bt1, g2, bt2, wss_cat, bss_cat, wqkv, bqkv, wo, bo,
      wm1, bm1, wm2, bm2)


def init_params(key, dim, mlp_ratio, noise_dim):
    hidden = int(dim * mlp_ratio)
    ks = jax.random.split(key, 10)
    f32, bf16 = jnp.float32, jnp.bfloat16

    def uniform(k, shape, bound, dtype=f32):
        return jax.random.uniform(k, shape, f32, -bound, bound).astype(dtype)

    b_in = 1.0 / sqrt(dim)
    b_h = 1.0 / sqrt(hidden)

    # ConditionalLayerNorm 1 (LN affine identity, trunc_normal(0.02) proj)
    g1 = jnp.ones((1, dim), f32)
    bt1 = jnp.zeros((1, dim), f32)
    wss1 = 0.02 * jax.random.normal(ks[0], (noise_dim, 2 * dim), f32)
    bss1 = jnp.zeros((1, 2 * dim), f32)
    # MultiheadAttention: stored (in, out); matmul weights in bf16 for the MXU
    wqkv = uniform(ks[1], (dim, 3 * dim), b_in, bf16)
    bqkv = uniform(ks[2], (1, 3 * dim), b_in)
    wo = uniform(ks[3], (dim, dim), b_in, bf16)
    bo = uniform(ks[4], (1, dim), b_in)
    # ConditionalLayerNorm 2
    g2 = jnp.ones((1, dim), f32)
    bt2 = jnp.zeros((1, dim), f32)
    wss2 = 0.02 * jax.random.normal(ks[5], (noise_dim, 2 * dim), f32)
    bss2 = jnp.zeros((1, 2 * dim), f32)
    # FeedForward
    wm1 = uniform(ks[6], (dim, hidden), b_in, bf16)
    bm1 = uniform(ks[7], (1, hidden), b_in)
    wm2 = uniform(ks[8], (hidden, dim), b_h, bf16)
    bm2 = uniform(ks[9], (1, dim), b_h)

    return (g1, bt1, wss1, bss1, wqkv, bqkv, wo, bo,
            g2, bt2, wss2, bss2, wm1, bm1, wm2, bm2)


def reference(x, noise_embedding, params, *, num_heads):
    """Pure-JAX, all-f32, exact-erf GELU reference (module semantics)."""
    (g1, bt1, wss1, bss1, wqkv, bqkv, wo, bo,
     g2, bt2, wss2, bss2, wm1, bm1, wm2, bm2) = params
    f32 = jnp.float32
    wqkv, wo, wm1, wm2 = (w.astype(f32) for w in (wqkv, wo, wm1, wm2))
    B, S, D = x.shape
    hd = D // num_heads

    def cond_ln(xx, gamma, beta, wss, bss):
        mean = jnp.mean(xx, axis=-1, keepdims=True)
        var = jnp.mean((xx - mean) ** 2, axis=-1, keepdims=True)
        normed = (xx - mean) / jnp.sqrt(var + 1e-5) * gamma + beta
        ss = noise_embedding @ wss + bss
        scale = jnp.clip(ss[:, :D], -0.9, 10.0)[:, None, :]
        shift = ss[:, D:][:, None, :]
        return normed * (1.0 + scale) + shift

    xn = cond_ln(x, g1, bt1, wss1, bss1)
    qkv = xn @ wqkv + bqkv
    q, k, v = qkv[..., :D], qkv[..., D:2 * D], qkv[..., 2 * D:]
    q = q.reshape(B, S, num_heads, hd).transpose(0, 2, 1, 3) * (1.0 / sqrt(hd))
    k = k.reshape(B, S, num_heads, hd).transpose(0, 2, 1, 3)
    v = v.reshape(B, S, num_heads, hd).transpose(0, 2, 1, 3)
    s = jnp.einsum('bhqd,bhkd->bhqk', q, k)
    p = jax.nn.softmax(s, axis=-1)
    ctx = jnp.einsum('bhqk,bhkd->bhqd', p, v)
    ctx = ctx.transpose(0, 2, 1, 3).reshape(B, S, D)
    x1 = x + ctx @ wo + bo

    x2n = cond_ln(x1, g2, bt2, wss2, bss2)
    h = jax.nn.gelu(x2n @ wm1 + bm1, approximate=False)
    return x1 + h @ wm2 + bm2


if __name__ == "__main__":
    batch = 8          # -> Bt=2, grid of 4 batch tiles (pipelined; both v7x TCs)
    seq = 8
    dim = 128          # lane-dense feature dim
    num_heads = 4
    mlp_ratio = 4.0
    noise_dim = 128    # module default

    key = jax.random.PRNGKey(0)
    kx, kn, kp = jax.random.split(key, 3)
    x = jax.random.normal(kx, (batch, seq, dim), jnp.float32)
    noise_emb = jax.random.normal(kn, (batch, noise_dim), jnp.float32)
    params = init_params(kp, dim, mlp_ratio, noise_dim)

    out = jax.block_until_ready(
        encoder_block(x, noise_emb, params, num_heads=num_heads))
    ref = reference(x, noise_emb, params, num_heads=num_heads)

    assert out.shape == x.shape
    # Tolerance covers bf16 MXU operands, tanh-GELU and the EUP approx
    # reciprocal vs. the all-f32 / exact-erf XLA reference.
    assert jnp.allclose(out, ref, atol=5e-2, rtol=5e-2), "mismatch vs reference"

    print("KERNEL_OK")
</pallas_src>

<mosaic_0001>
module attributes {stable_mosaic.version = 11 : i64} {
  func.func @encoder_block_kernel(%arg0: i32, %arg1: memref<2x8x128xf32, #tpu.memory_space<vmem>>, %arg2: memref<2x1x128xf32, #tpu.memory_space<vmem>>, %arg3: memref<1x128xf32, #tpu.memory_space<vmem>>, %arg4: memref<1x128xf32, #tpu.memory_space<vmem>>, %arg5: memref<1x128xf32, #tpu.memory_space<vmem>>, %arg6: memref<1x128xf32, #tpu.memory_space<vmem>>, %arg7: memref<128x512xf32, #tpu.memory_space<vmem>>, %arg8: memref<1x512xf32, #tpu.memory_space<vmem>>, %arg9: memref<128x384xbf16, #tpu.memory_space<vmem>>, %arg10: memref<1x384xf32, #tpu.memory_space<vmem>>, %arg11: memref<128x128xbf16, #tpu.memory_space<vmem>>, %arg12: memref<1x128xf32, #tpu.memory_space<vmem>>, %arg13: memref<128x512xbf16, #tpu.memory_space<vmem>>, %arg14: memref<1x512xf32, #tpu.memory_space<vmem>>, %arg15: memref<512x128xbf16, #tpu.memory_space<vmem>>, %arg16: memref<1x128xf32, #tpu.memory_space<vmem>>, %arg17: memref<2x8x128xf32, #tpu.memory_space<vmem>>) attributes {dimension_semantics = [#tpu.dimension_semantics<parallel>], iteration_bounds = array<i64: 4>, scalar_prefetch = 0 : i64, scratch_operands = 0 : i64, tpu.core_type = #tpu.core_type<tc>, window_params = [{transform_indices = @transform_0, window_bounds = array<i64: 2, 8, 128>}, {transform_indices = @transform_1, window_bounds = array<i64: 2, 1, 128>}, {pipeline_mode = #tpu.pipeline_mode<synchronous>, transform_indices = @transform_2, window_bounds = array<i64: 1, 128>}, {pipeline_mode = #tpu.pipeline_mode<synchronous>, transform_indices = @transform_3, window_bounds = array<i64: 1, 128>}, {pipeline_mode = #tpu.pipeline_mode<synchronous>, transform_indices = @transform_4, window_bounds = array<i64: 1, 128>}, {pipeline_mode = #tpu.pipeline_mode<synchronous>, transform_indices = @transform_5, window_bounds = array<i64: 1, 128>}, {pipeline_mode = #tpu.pipeline_mode<synchronous>, transform_indices = @transform_6, window_bounds = array<i64: 128, 512>}, {pipeline_mode = #tpu.pipeline_mode<synchronous>, transform_indices = @transform_7, window_bounds = array<i64: 1, 512>}, {pipeline_mode = #tpu.pipeline_mode<synchronous>, transform_indices = @transform_8, window_bounds = array<i64: 128, 384>}, {pipeline_mode = #tpu.pipeline_mode<synchronous>, transform_indices = @transform_9, window_bounds = array<i64: 1, 384>}, {pipeline_mode = #tpu.pipeline_mode<synchronous>, transform_indices = @transform_10, window_bounds = array<i64: 128, 128>}, {pipeline_mode = #tpu.pipeline_mode<synchronous>, transform_indices = @transform_11, window_bounds = array<i64: 1, 128>}, {pipeline_mode = #tpu.pipeline_mode<synchronous>, transform_indices = @transform_12, window_bounds = array<i64: 128, 512>}, {pipeline_mode = #tpu.pipeline_mode<synchronous>, transform_indices = @transform_13, window_bounds = array<i64: 1, 512>}, {pipeline_mode = #tpu.pipeline_mode<synchronous>, transform_indices = @transform_14, window_bounds = array<i64: 512, 128>}, {pipeline_mode = #tpu.pipeline_mode<synchronous>, transform_indices = @transform_15, window_bounds = array<i64: 1, 128>}, {transform_indices = @transform_16, window_bounds = array<i64: 2, 8, 128>}]} {
    %c0 = arith.constant 0 : index
    %c0_0 = arith.constant 0 : index
    %c0_1 = arith.constant 0 : index
    %0 = vector.load %arg1[%c0, %c0_0, %c0_1] : memref<2x8x128xf32, #tpu.memory_space<vmem>>, vector<2x8x128xf32>
    %c0_2 = arith.constant 0 : index
    %c0_3 = arith.constant 0 : index
    %c0_4 = arith.constant 0 : index
    %1 = vector.load %arg2[%c0_2, %c0_3, %c0_4] : memref<2x1x128xf32, #tpu.memory_space<vmem>>, vector<2x1x128xf32>
    %2 = vector.shape_cast %1 : vector<2x1x128xf32> to vector<2x128xf32>
    %c0_5 = arith.constant 0 : index
    %c0_6 = arith.constant 0 : index
    %3 = vector.load %arg7[%c0_5, %c0_6] : memref<128x512xf32, #tpu.memory_space<vmem>>, vector<128x512xf32>
    %cst = arith.constant dense<0.000000e+00> : vector<2x512xf32>
    %4 = tpu.matmul %2, %3, %cst {dimension_numbers = #tpu.dot_dimension_numbers<[1], [0], [0], [1], [0, 0, 1, 1], [], []>} : vector<2x128xf32>, vector<128x512xf32>, vector<2x512xf32> -> vector<2x512xf32>
    %c0_7 = arith.constant 0 : index
    %c0_8 = arith.constant 0 : index
    %5 = vector.load %arg8[%c0_7, %c0_8] : memref<1x512xf32, #tpu.memory_space<vmem>>, vector<1x512xf32>
    %6 = vector.broadcast %5 : vector<1x512xf32> to vector<2x512xf32>
    %7 = arith.addf %4, %6 : vector<2x512xf32>
    %8 = vector.extract_strided_slice %7 {offsets = [0, 0], sizes = [2, 128], strides = [1, 1]} : vector<2x512xf32> to vector<2x128xf32>
    %cst_9 = arith.constant -0.899999976 : f32
    %cst_10 = arith.constant 1.000000e+01 : f32
    %9 = vector.broadcast %cst_9 : f32 to vector<2x128xf32>
    %10 = arith.maximumf %9, %8 : vector<2x128xf32>
    %11 = vector.broadcast %cst_10 : f32 to vector<2x128xf32>
    %12 = arith.minimumf %11, %10 : vector<2x128xf32>
    %13 = vector.shape_cast %12 : vector<2x128xf32> to vector<2x1x128xf32>
    %14 = vector.extract_strided_slice %7 {offsets = [0, 128], sizes = [2, 128], strides = [1, 1]} : vector<2x512xf32> to vector<2x128xf32>
    %15 = vector.shape_cast %14 : vector<2x128xf32> to vector<2x1x128xf32>
    %16 = vector.extract_strided_slice %7 {offsets = [0, 256], sizes = [2, 128], strides = [1, 1]} : vector<2x512xf32> to vector<2x128xf32>
    %cst_11 = arith.constant -0.899999976 : f32
    %cst_12 = arith.constant 1.000000e+01 : f32
    %17 = vector.broadcast %cst_11 : f32 to vector<2x128xf32>
    %18 = arith.maximumf %17, %16 : vector<2x128xf32>
    %19 = vector.broadcast %cst_12 : f32 to vector<2x128xf32>
    %20 = arith.minimumf %19, %18 : vector<2x128xf32>
    %21 = vector.shape_cast %20 : vector<2x128xf32> to vector<2x1x128xf32>
    %22 = vector.extract_strided_slice %7 {offsets = [0, 384], sizes = [2, 128], strides = [1, 1]} : vector<2x512xf32> to vector<2x128xf32>
    %23 = vector.shape_cast %22 : vector<2x128xf32> to vector<2x1x128xf32>
    %c0_13 = arith.constant 0 : index
    %c0_14 = arith.constant 0 : index
    %24 = vector.load %arg3[%c0_13, %c0_14] : memref<1x128xf32, #tpu.memory_space<vmem>>, vector<1x128xf32>
    %c0_15 = arith.constant 0 : index
    %c0_16 = arith.constant 0 : index
    %25 = vector.load %arg4[%c0_15, %c0_16] : memref<1x128xf32, #tpu.memory_space<vmem>>, vector<1x128xf32>
    %cst_17 = arith.constant dense<0.000000e+00> : vector<2x8xf32>
    %26 = vector.multi_reduction <add>, %0, %cst_17 [2] : vector<2x8x128xf32> to vector<2x8xf32>
    %27 = vector.shape_cast %26 : vector<2x8xf32> to vector<2x8x1xf32>
    %cst_18 = arith.constant 1.280000e+02 : f32
    %28 = vector.broadcast %cst_18 : f32 to vector<2x8x1xf32>
    %29 = arith.divf %27, %28 : vector<2x8x1xf32>
    %30 = vector.broadcast %29 : vector<2x8x1xf32> to vector<2x8x128xf32>
    %31 = arith.subf %0, %30 : vector<2x8x128xf32>
    %32 = arith.mulf %31, %31 : vector<2x8x128xf32>
    %cst_19 = arith.constant dense<0.000000e+00> : vector<2x8xf32>
    %33 = vector.multi_reduction <add>, %32, %cst_19 [2] : vector<2x8x128xf32> to vector<2x8xf32>
    %34 = vector.shape_cast %33 : vector<2x8xf32> to vector<2x8x1xf32>
    %cst_20 = arith.constant 1.280000e+02 : f32
    %35 = vector.broadcast %cst_20 : f32 to vector<2x8x1xf32>
    %36 = arith.divf %34, %35 : vector<2x8x1xf32>
    %37 = vector.broadcast %29 : vector<2x8x1xf32> to vector<2x8x128xf32>
    %38 = arith.subf %0, %37 : vector<2x8x128xf32>
    %cst_21 = arith.constant 9.99999974E-6 : f32
    %39 = vector.broadcast %cst_21 : f32 to vector<2x8x1xf32>
    %40 = arith.addf %36, %39 : vector<2x8x1xf32>
    %41 = math.rsqrt %40 : vector<2x8x1xf32>
    %42 = vector.broadcast %41 : vector<2x8x1xf32> to vector<2x8x128xf32>
    %43 = arith.mulf %38, %42 : vector<2x8x128xf32>
    %44 = vector.shape_cast %24 : vector<1x128xf32> to vector<1x1x128xf32>
    %45 = vector.broadcast %44 : vector<1x1x128xf32> to vector<2x8x128xf32>
    %46 = arith.mulf %43, %45 : vector<2x8x128xf32>
    %47 = vector.shape_cast %25 : vector<1x128xf32> to vector<1x1x128xf32>
    %48 = vector.broadcast %47 : vector<1x1x128xf32> to vector<2x8x128xf32>
    %49 = arith.addf %46, %48 : vector<2x8x128xf32>
    %cst_22 = arith.constant 1.000000e+00 : f32
    %50 = vector.broadcast %cst_22 : f32 to vector<2x1x128xf32>
    %51 = arith.addf %50, %13 : vector<2x1x128xf32>
    %52 = vector.broadcast %51 : vector<2x1x128xf32> to vector<2x8x128xf32>
    %53 = arith.mulf %49, %52 : vector<2x8x128xf32>
    %54 = vector.broadcast %15 : vector<2x1x128xf32> to vector<2x8x128xf32>
    %55 = arith.addf %53, %54 : vector<2x8x128xf32>
    %56 = vector.shape_cast %55 : vector<2x8x128xf32> to vector<16x128xf32>
    %57 = arith.truncf %56 : vector<16x128xf32> to vector<16x128xbf16>
    %c0_23 = arith.constant 0 : index
    %c0_24 = arith.constant 0 : index
    %58 = vector.load %arg9[%c0_23, %c0_24] : memref<128x384xbf16, #tpu.memory_space<vmem>>, vector<128x384xbf16>
    %cst_25 = arith.constant dense<0.000000e+00> : vector<16x384xf32>
    %59 = tpu.matmul %57, %58, %cst_25 {dimension_numbers = #tpu.dot_dimension_numbers<[1], [0], [0], [1], [0, 0, 1, 1], [], []>} : vector<16x128xbf16>, vector<128x384xbf16>, vector<16x384xf32> -> vector<16x384xf32>
    %c0_26 = arith.constant 0 : index
    %c0_27 = arith.constant 0 : index
    %60 = vector.load %arg10[%c0_26, %c0_27] : memref<1x384xf32, #tpu.memory_space<vmem>>, vector<1x384xf32>
    %61 = vector.broadcast %60 : vector<1x384xf32> to vector<16x384xf32>
    %62 = arith.addf %59, %61 : vector<16x384xf32>
    %63 = vector.shape_cast %62 : vector<16x384xf32> to vector<2x8x384xf32>
    %64 = vector.extract_strided_slice %63 {offsets = [0, 0, 0], sizes = [2, 8, 128], strides = [1, 1, 1]} : vector<2x8x384xf32> to vector<2x8x128xf32>
    %cst_28 = arith.constant 0.176776692 : f32
    %65 = vector.broadcast %cst_28 : f32 to vector<2x8x128xf32>
    %66 = arith.mulf %64, %65 : vector<2x8x128xf32>
    %67 = vector.extract_strided_slice %63 {offsets = [0, 0, 128], sizes = [2, 8, 128], strides = [1, 1, 1]} : vector<2x8x384xf32> to vector<2x8x128xf32>
    %68 = vector.extract_strided_slice %63 {offsets = [0, 0, 256], sizes = [2, 8, 128], strides = [1, 1, 1]} : vector<2x8x384xf32> to vector<2x8x128xf32>
    %69 = vector.extract_strided_slice %66 {offsets = [0, 0, 0], sizes = [2, 8, 32], strides = [1, 1, 1]} : vector<2x8x128xf32> to vector<2x8x32xf32>
    %70 = vector.extract_strided_slice %67 {offsets = [0, 0, 0], sizes = [2, 8, 32], strides = [1, 1, 1]} : vector<2x8x128xf32> to vector<2x8x32xf32>
    %71 = vector.extract_strided_slice %68 {offsets = [0, 0, 0], sizes = [2, 8, 32], strides = [1, 1, 1]} : vector<2x8x128xf32> to vector<2x8x32xf32>
    "tpu.trace_start"() <{level = 10 : i32, message = "bqd,bkd->bqk"}> : () -> ()
    %cst_29 = arith.constant dense<0.000000e+00> : vector<2x8x8xf32>
    %72 = tpu.matmul %69, %70, %cst_29 {dimension_numbers = #tpu.dot_dimension_numbers<[2], [2], [1], [1], [0, 0, 0, 1, 1, 1], [0], [0]>} : vector<2x8x32xf32>, vector<2x8x32xf32>, vector<2x8x8xf32> -> vector<2x8x8xf32>
    "tpu.trace_stop"() : () -> ()
    %cst_30 = arith.constant dense<0xFF800000> : vector<2x8xf32>
    %73 = vector.multi_reduction <maximumf>, %72, %cst_30 [2] : vector<2x8x8xf32> to vector<2x8xf32>
    %74 = vector.shape_cast %73 : vector<2x8xf32> to vector<2x8x1xf32>
    %75 = vector.broadcast %74 : vector<2x8x1xf32> to vector<2x8x8xf32>
    %76 = arith.subf %72, %75 : vector<2x8x8xf32>
    %77 = math.exp %76 : vector<2x8x8xf32>
    %cst_31 = arith.constant dense<0.000000e+00> : vector<2x8xf32>
    %78 = vector.multi_reduction <add>, %77, %cst_31 [2] : vector<2x8x8xf32> to vector<2x8xf32>
    %79 = vector.shape_cast %78 : vector<2x8xf32> to vector<2x8x1xf32>
    %80 = tpu.reciprocal %79 {approx = true} : vector<2x8x1xf32> -> vector<2x8x1xf32>
    %81 = vector.broadcast %80 : vector<2x8x1xf32> to vector<2x8x8xf32>
    %82 = arith.mulf %77, %81 : vector<2x8x8xf32>
    "tpu.trace_start"() <{level = 10 : i32, message = "bqk,bkd->bqd"}> : () -> ()
    %cst_32 = arith.constant dense<0.000000e+00> : vector<2x8x32xf32>
    %83 = tpu.matmul %82, %71, %cst_32 {dimension_numbers = #tpu.dot_dimension_numbers<[2], [1], [1], [2], [0, 0, 0, 1, 1, 2], [0], [0]>} : vector<2x8x8xf32>, vector<2x8x32xf32>, vector<2x8x32xf32> -> vector<2x8x32xf32>
    "tpu.trace_stop"() : () -> ()
    %84 = vector.extract_strided_slice %66 {offsets = [0, 0, 32], sizes = [2, 8, 32], strides = [1, 1, 1]} : vector<2x8x128xf32> to vector<2x8x32xf32>
    %85 = vector.extract_strided_slice %67 {offsets = [0, 0, 32], sizes = [2, 8, 32], strides = [1, 1, 1]} : vector<2x8x128xf32> to vector<2x8x32xf32>
    %86 = vector.extract_strided_slice %68 {offsets = [0, 0, 32], sizes = [2, 8, 32], strides = [1, 1, 1]} : vector<2x8x128xf32> to vector<2x8x32xf32>
    "tpu.trace_start"() <{level = 10 : i32, message = "bqd,bkd->bqk"}> : () -> ()
    %cst_33 = arith.constant dense<0.000000e+00> : vector<2x8x8xf32>
    %87 = tpu.matmul %84, %85, %cst_33 {dimension_numbers = #tpu.dot_dimension_numbers<[2], [2], [1], [1], [0, 0, 0, 1, 1, 1], [0], [0]>} : vector<2x8x32xf32>, vector<2x8x32xf32>, vector<2x8x8xf32> -> vector<2x8x8xf32>
    "tpu.trace_stop"() : () -> ()
    %cst_34 = arith.constant dense<0xFF800000> : vector<2x8xf32>
    %88 = vector.multi_reduction <maximumf>, %87, %cst_34 [2] : vector<2x8x8xf32> to vector<2x8xf32>
    %89 = vector.shape_cast %88 : vector<2x8xf32> to vector<2x8x1xf32>
    %90 = vector.broadcast %89 : vector<2x8x1xf32> to vector<2x8x8xf32>
    %91 = arith.subf %87, %90 : vector<2x8x8xf32>
    %92 = math.exp %91 : vector<2x8x8xf32>
    %cst_35 = arith.constant dense<0.000000e+00> : vector<2x8xf32>
    %93 = vector.multi_reduction <add>, %92, %cst_35 [2] : vector<2x8x8xf32> to vector<2x8xf32>
    %94 = vector.shape_cast %93 : vector<2x8xf32> to vector<2x8x1xf32>
    %95 = tpu.reciprocal %94 {approx = true} : vector<2x8x1xf32> -> vector<2x8x1xf32>
    %96 = vector.broadcast %95 : vector<2x8x1xf32> to vector<2x8x8xf32>
    %97 = arith.mulf %92, %96 : vector<2x8x8xf32>
    "tpu.trace_start"() <{level = 10 : i32, message = "bqk,bkd->bqd"}> : () -> ()
    %cst_36 = arith.constant dense<0.000000e+00> : vector<2x8x32xf32>
    %98 = tpu.matmul %97, %86, %cst_36 {dimension_numbers = #tpu.dot_dimension_numbers<[2], [1], [1], [2], [0, 0, 0, 1, 1, 2], [0], [0]>} : vector<2x8x8xf32>, vector<2x8x32xf32>, vector<2x8x32xf32> -> vector<2x8x32xf32>
    "tpu.trace_stop"() : () -> ()
    %99 = vector.extract_strided_slice %66 {offsets = [0, 0, 64], sizes = [2, 8, 32], strides = [1, 1, 1]} : vector<2x8x128xf32> to vector<2x8x32xf32>
    %100 = vector.extract_strided_slice %67 {offsets = [0, 0, 64], sizes = [2, 8, 32], strides = [1, 1, 1]} : vector<2x8x128xf32> to vector<2x8x32xf32>
    %101 = vector.extract_strided_slice %68 {offsets = [0, 0, 64], sizes = [2, 8, 32], strides = [1, 1, 1]} : vector<2x8x128xf32> to vector<2x8x32xf32>
    "tpu.trace_start"() <{level = 10 : i32, message = "bqd,bkd->bqk"}> : () -> ()
    %cst_37 = arith.constant dense<0.000000e+00> : vector<2x8x8xf32>
    %102 = tpu.matmul %99, %100, %cst_37 {dimension_numbers = #tpu.dot_dimension_numbers<[2], [2], [1], [1], [0, 0, 0, 1, 1, 1], [0], [0]>} : vector<2x8x32xf32>, vector<2x8x32xf32>, vector<2x8x8xf32> -> vector<2x8x8xf32>
    "tpu.trace_stop"() : () -> ()
    %cst_38 = arith.constant dense<0xFF800000> : vector<2x8xf32>
    %103 = vector.multi_reduction <maximumf>, %102, %cst_38 [2] : vector<2x8x8xf32> to vector<2x8xf32>
    %104 = vector.shape_cast %103 : vector<2x8xf32> to vector<2x8x1xf32>
    %105 = vector.broadcast %104 : vector<2x8x1xf32> to vector<2x8x8xf32>
    %106 = arith.subf %102, %105 : vector<2x8x8xf32>
    %107 = math.exp %106 : vector<2x8x8xf32>
    %cst_39 = arith.constant dense<0.000000e+00> : vector<2x8xf32>
    %108 = vector.multi_reduction <add>, %107, %cst_39 [2] : vector<2x8x8xf32> to vector<2x8xf32>
    %109 = vector.shape_cast %108 : vector<2x8xf32> to vector<2x8x1xf32>
    %110 = tpu.reciprocal %109 {approx = true} : vector<2x8x1xf32> -> vector<2x8x1xf32>
    %111 = vector.broadcast %110 : vector<2x8x1xf32> to vector<2x8x8xf32>
    %112 = arith.mulf %107, %111 : vector<2x8x8xf32>
    "tpu.trace_start"() <{level = 10 : i32, message = "bqk,bkd->bqd"}> : () -> ()
    %cst_40 = arith.constant dense<0.000000e+00> : vector<2x8x32xf32>
    %113 = tpu.matmul %112, %101, %cst_40 {dimension_numbers = #tpu.dot_dimension_numbers<[2], [1], [1], [2], [0, 0, 0, 1, 1, 2], [0], [0]>} : vector<2x8x8xf32>, vector<2x8x32xf32>, vector<2x8x32xf32> -> vector<2x8x32xf32>
    "tpu.trace_stop"() : () -> ()
    %114 = vector.extract_strided_slice %66 {offsets = [0, 0, 96], sizes = [2, 8, 32], strides = [1, 1, 1]} : vector<2x8x128xf32> to vector<2x8x32xf32>
    %115 = vector.extract_strided_slice %67 {offsets = [0, 0, 96], sizes = [2, 8, 32], strides = [1, 1, 1]} : vector<2x8x128xf32> to vector<2x8x32xf32>
    %116 = vector.extract_strided_slice %68 {offsets = [0, 0, 96], sizes = [2, 8, 32], strides = [1, 1, 1]} : vector<2x8x128xf32> to vector<2x8x32xf32>
    "tpu.trace_start"() <{level = 10 : i32, message = "bqd,bkd->bqk"}> : () -> ()
    %cst_41 = arith.constant dense<0.000000e+00> : vector<2x8x8xf32>
    %117 = tpu.matmul %114, %115, %cst_41 {dimension_numbers = #tpu.dot_dimension_numbers<[2], [2], [1], [1], [0, 0, 0, 1, 1, 1], [0], [0]>} : vector<2x8x32xf32>, vector<2x8x32xf32>, vector<2x8x8xf32> -> vector<2x8x8xf32>
    "tpu.trace_stop"() : () -> ()
    %cst_42 = arith.constant dense<0xFF800000> : vector<2x8xf32>
    %118 = vector.multi_reduction <maximumf>, %117, %cst_42 [2] : vector<2x8x8xf32> to vector<2x8xf32>
    %119 = vector.shape_cast %118 : vector<2x8xf32> to vector<2x8x1xf32>
    %120 = vector.broadcast %119 : vector<2x8x1xf32> to vector<2x8x8xf32>
    %121 = arith.subf %117, %120 : vector<2x8x8xf32>
    %122 = math.exp %121 : vector<2x8x8xf32>
    %cst_43 = arith.constant dense<0.000000e+00> : vector<2x8xf32>
    %123 = vector.multi_reduction <add>, %122, %cst_43 [2] : vector<2x8x8xf32> to vector<2x8xf32>
    %124 = vector.shape_cast %123 : vector<2x8xf32> to vector<2x8x1xf32>
    %125 = tpu.reciprocal %124 {approx = true} : vector<2x8x1xf32> -> vector<2x8x1xf32>
    %126 = vector.broadcast %125 : vector<2x8x1xf32> to vector<2x8x8xf32>
    %127 = arith.mulf %122, %126 : vector<2x8x8xf32>
    "tpu.trace_start"() <{level = 10 : i32, message = "bqk,bkd->bqd"}> : () -> ()
    %cst_44 = arith.constant dense<0.000000e+00> : vector<2x8x32xf32>
    %128 = tpu.matmul %127, %116, %cst_44 {dimension_numbers = #tpu.dot_dimension_numbers<[2], [1], [1], [2], [0, 0, 0, 1, 1, 2], [0], [0]>} : vector<2x8x8xf32>, vector<2x8x32xf32>, vector<2x8x32xf32> -> vector<2x8x32xf32>
    "tpu.trace_stop"() : () -> ()
    %129 = tpu.concatenate %83, %98, %113, %128 in 2 : vector<2x8x32xf32>, vector<2x8x32xf32>, vector<2x8x32xf32>, vector<2x8x32xf32> -> vector<2x8x128xf32>
    %130 = vector.shape_cast %129 : vector<2x8x128xf32> to vector<16x128xf32>
    %131 = arith.truncf %130 : vector<16x128xf32> to vector<16x128xbf16>
    %c0_45 = arith.constant 0 : index
    %c0_46 = arith.constant 0 : index
    %132 = vector.load %arg11[%c0_45, %c0_46] : memref<128x128xbf16, #tpu.memory_space<vmem>>, vector<128x128xbf16>
    %cst_47 = arith.constant dense<0.000000e+00> : vector<16x128xf32>
    %133 = tpu.matmul %131, %132, %cst_47 {dimension_numbers = #tpu.dot_dimension_numbers<[1], [0], [0], [1], [0, 0, 1, 1], [], []>} : vector<16x128xbf16>, vector<128x128xbf16>, vector<16x128xf32> -> vector<16x128xf32>
    %c0_48 = arith.constant 0 : index
    %c0_49 = arith.constant 0 : index
    %134 = vector.load %arg12[%c0_48, %c0_49] : memref<1x128xf32, #tpu.memory_space<vmem>>, vector<1x128xf32>
    %135 = vector.broadcast %134 : vector<1x128xf32> to vector<16x128xf32>
    %136 = arith.addf %133, %135 : vector<16x128xf32>
    %137 = vector.shape_cast %0 : vector<2x8x128xf32> to vector<16x128xf32>
    %138 = arith.addf %137, %136 : vector<16x128xf32>
    %139 = vector.shape_cast %138 : vector<16x128xf32> to vector<2x8x128xf32>
    %c0_50 = arith.constant 0 : index
    %c0_51 = arith.constant 0 : index
    %140 = vector.load %arg5[%c0_50, %c0_51] : memref<1x128xf32, #tpu.memory_space<vmem>>, vector<1x128xf32>
    %c0_52 = arith.constant 0 : index
    %c0_53 = arith.constant 0 : index
    %141 = vector.load %arg6[%c0_52, %c0_53] : memref<1x128xf32, #tpu.memory_space<vmem>>, vector<1x128xf32>
    %cst_54 = arith.constant dense<0.000000e+00> : vector<2x8xf32>
    %142 = vector.multi_reduction <add>, %139, %cst_54 [2] : vector<2x8x128xf32> to vector<2x8xf32>
    %143 = vector.shape_cast %142 : vector<2x8xf32> to vector<2x8x1xf32>
    %cst_55 = arith.constant 1.280000e+02 : f32
    %144 = vector.broadcast %cst_55 : f32 to vector<2x8x1xf32>
    %145 = arith.divf %143, %144 : vector<2x8x1xf32>
    %146 = vector.broadcast %145 : vector<2x8x1xf32> to vector<2x8x128xf32>
    %147 = arith.subf %139, %146 : vector<2x8x128xf32>
    %148 = arith.mulf %147, %147 : vector<2x8x128xf32>
    %cst_56 = arith.constant dense<0.000000e+00> : vector<2x8xf32>
    %149 = vector.multi_reduction <add>, %148, %cst_56 [2] : vector<2x8x128xf32> to vector<2x8xf32>
    %150 = vector.shape_cast %149 : vector<2x8xf32> to vector<2x8x1xf32>
    %cst_57 = arith.constant 1.280000e+02 : f32
    %151 = vector.broadcast %cst_57 : f32 to vector<2x8x1xf32>
    %152 = arith.divf %150, %151 : vector<2x8x1xf32>
    %153 = vector.broadcast %145 : vector<2x8x1xf32> to vector<2x8x128xf32>
    %154 = arith.subf %139, %153 : vector<2x8x128xf32>
    %cst_58 = arith.constant 9.99999974E-6 : f32
    %155 = vector.broadcast %cst_58 : f32 to vector<2x8x1xf32>
    %156 = arith.addf %152, %155 : vector<2x8x1xf32>
    %157 = math.rsqrt %156 : vector<2x8x1xf32>
    %158 = vector.broadcast %157 : vector<2x8x1xf32> to vector<2x8x128xf32>
    %159 = arith.mulf %154, %158 : vector<2x8x128xf32>
    %160 = vector.shape_cast %140 : vector<1x128xf32> to vector<1x1x128xf32>
    %161 = vector.broadcast %160 : vector<1x1x128xf32> to vector<2x8x128xf32>
    %162 = arith.mulf %159, %161 : vector<2x8x128xf32>
    %163 = vector.shape_cast %141 : vector<1x128xf32> to vector<1x1x128xf32>
    %164 = vector.broadcast %163 : vector<1x1x128xf32> to vector<2x8x128xf32>
    %165 = arith.addf %162, %164 : vector<2x8x128xf32>
    %cst_59 = arith.constant 1.000000e+00 : f32
    %166 = vector.broadcast %cst_59 : f32 to vector<2x1x128xf32>
    %167 = arith.addf %166, %21 : vector<2x1x128xf32>
    %168 = vector.broadcast %167 : vector<2x1x128xf32> to vector<2x8x128xf32>
    %169 = arith.mulf %165, %168 : vector<2x8x128xf32>
    %170 = vector.broadcast %23 : vector<2x1x128xf32> to vector<2x8x128xf32>
    %171 = arith.addf %169, %170 : vector<2x8x128xf32>
    %172 = vector.shape_cast %171 : vector<2x8x128xf32> to vector<16x128xf32>
    %173 = arith.truncf %172 : vector<16x128xf32> to vector<16x128xbf16>
    %c0_60 = arith.constant 0 : index
    %c0_61 = arith.constant 0 : index
    %174 = vector.load %arg13[%c0_60, %c0_61] : memref<128x512xbf16, #tpu.memory_space<vmem>>, vector<128x512xbf16>
    %cst_62 = arith.constant dense<0.000000e+00> : vector<16x512xf32>
    %175 = tpu.matmul %173, %174, %cst_62 {dimension_numbers = #tpu.dot_dimension_numbers<[1], [0], [0], [1], [0, 0, 1, 1], [], []>} : vector<16x128xbf16>, vector<128x512xbf16>, vector<16x512xf32> -> vector<16x512xf32>
    %c0_63 = arith.constant 0 : index
    %c0_64 = arith.constant 0 : index
    %176 = vector.load %arg14[%c0_63, %c0_64] : memref<1x512xf32, #tpu.memory_space<vmem>>, vector<1x512xf32>
    %177 = vector.broadcast %176 : vector<1x512xf32> to vector<16x512xf32>
    %178 = arith.addf %175, %177 : vector<16x512xf32>
    %179 = arith.mulf %178, %178 : vector<16x512xf32>
    %180 = arith.mulf %178, %179 : vector<16x512xf32>
    %cst_65 = arith.constant 4.471500e-02 : f32
    %181 = vector.broadcast %cst_65 : f32 to vector<16x512xf32>
    %182 = arith.mulf %181, %180 : vector<16x512xf32>
    %183 = arith.addf %178, %182 : vector<16x512xf32>
    %cst_66 = arith.constant 0.797884583 : f32
    %184 = vector.broadcast %cst_66 : f32 to vector<16x512xf32>
    %185 = arith.mulf %184, %183 : vector<16x512xf32>
    %186 = math.tanh %185 : vector<16x512xf32>
    %cst_67 = arith.constant 1.000000e+00 : f32
    %187 = vector.broadcast %cst_67 : f32 to vector<16x512xf32>
    %188 = arith.addf %187, %186 : vector<16x512xf32>
    %cst_68 = arith.constant 5.000000e-01 : f32
    %189 = vector.broadcast %cst_68 : f32 to vector<16x512xf32>
    %190 = arith.mulf %189, %188 : vector<16x512xf32>
    %191 = arith.mulf %178, %190 : vector<16x512xf32>
    %192 = arith.truncf %191 : vector<16x512xf32> to vector<16x512xbf16>
    %c0_69 = arith.constant 0 : index
    %c0_70 = arith.constant 0 : index
    %193 = vector.load %arg15[%c0_69, %c0_70] : memref<512x128xbf16, #tpu.memory_space<vmem>>, vector<512x128xbf16>
    %cst_71 = arith.constant dense<0.000000e+00> : vector<16x128xf32>
    %194 = tpu.matmul %192, %193, %cst_71 {dimension_numbers = #tpu.dot_dimension_numbers<[1], [0], [0], [1], [0, 0, 1, 1], [], []>} : vector<16x512xbf16>, vector<512x128xbf16>, vector<16x128xf32> -> vector<16x128xf32>
    %c0_72 = arith.constant 0 : index
    %c0_73 = arith.constant 0 : index
    %195 = vector.load %arg16[%c0_72, %c0_73] : memref<1x128xf32, #tpu.memory_space<vmem>>, vector<1x128xf32>
    %196 = vector.broadcast %195 : vector<1x128xf32> to vector<16x128xf32>
    %197 = arith.addf %194, %196 : vector<16x128xf32>
    %198 = arith.addf %138, %197 : vector<16x128xf32>
    %199 = vector.shape_cast %198 : vector<16x128xf32> to vector<2x8x128xf32>
    %c0_74 = arith.constant 0 : index
    %c0_75 = arith.constant 0 : index
    %c0_76 = arith.constant 0 : index
    %200 = vector.load %arg17[%c0_74, %c0_75, %c0_76] : memref<2x8x128xf32, #tpu.memory_space<vmem>>, vector<2x8x128xf32>
    tpu.vector_store %arg17[%c0_74, %c0_75, %c0_76], %199 {strides = array<i32>} : memref<2x8x128xf32, #tpu.memory_space<vmem>>, vector<2x8x128xf32>,
    return
  }
  func.func @transform_0(%arg0: i32) -> (i32, i32, i32) {
    %c0_i32 = arith.constant 0 : i32
    %c0_i32_0 = arith.constant 0 : i32
    %c0_i32_1 = arith.constant 0 : i32
    return %arg0, %c0_i32, %c0_i32_0 : i32, i32, i32
  }
  func.func @transform_1(%arg0: i32) -> (i32, i32, i32) {
    %c0_i32 = arith.constant 0 : i32
    %c0_i32_0 = arith.constant 0 : i32
    %c0_i32_1 = arith.constant 0 : i32
    return %arg0, %c0_i32, %c0_i32_0 : i32, i32, i32
  }
  func.func @transform_2(%arg0: i32) -> (i32, i32) {
    %c0_i32 = arith.constant 0 : i32
    %c0_i32_0 = arith.constant 0 : i32
    %c0_i32_1 = arith.constant 0 : i32
    return %c0_i32, %c0_i32_0 : i32, i32
  }
  func.func @transform_3(%arg0: i32) -> (i32, i32) {
    %c0_i32 = arith.constant 0 : i32
    %c0_i32_0 = arith.constant 0 : i32
    %c0_i32_1 = arith.constant 0 : i32
    return %c0_i32, %c0_i32_0 : i32, i32
  }
  func.func @transform_4(%arg0: i32) -> (i32, i32) {
    %c0_i32 = arith.constant 0 : i32
    %c0_i32_0 = arith.constant 0 : i32
    %c0_i32_1 = arith.constant 0 : i32
    return %c0_i32, %c0_i32_0 : i32, i32
  }
  func.func @transform_5(%arg0: i32) -> (i32, i32) {
    %c0_i32 = arith.constant 0 : i32
    %c0_i32_0 = arith.constant 0 : i32
    %c0_i32_1 = arith.constant 0 : i32
    return %c0_i32, %c0_i32_0 : i32, i32
  }
  func.func @transform_6(%arg0: i32) -> (i32, i32) {
    %c0_i32 = arith.constant 0 : i32
    %c0_i32_0 = arith.constant 0 : i32
    %c0_i32_1 = arith.constant 0 : i32
    return %c0_i32, %c0_i32_0 : i32, i32
  }
  func.func @transform_7(%arg0: i32) -> (i32, i32) {
    %c0_i32 = arith.constant 0 : i32
    %c0_i32_0 = arith.constant 0 : i32
    %c0_i32_1 = arith.constant 0 : i32
    return %c0_i32, %c0_i32_0 : i32, i32
  }
  func.func @transform_8(%arg0: i32) -> (i32, i32) {
    %c0_i32 = arith.constant 0 : i32
    %c0_i32_0 = arith.constant 0 : i32
    %c0_i32_1 = arith.constant 0 : i32
    return %c0_i32, %c0_i32_0 : i32, i32
  }
  func.func @transform_9(%arg0: i32) -> (i32, i32) {
    %c0_i32 = arith.constant 0 : i32
    %c0_i32_0 = arith.constant 0 : i32
    %c0_i32_1 = arith.constant 0 : i32
    return %c0_i32, %c0_i32_0 : i32, i32
  }
  func.func @transform_10(%arg0: i32) -> (i32, i32) {
    %c0_i32 = arith.constant 0 : i32
    %c0_i32_0 = arith.constant 0 : i32
    %c0_i32_1 = arith.constant 0 : i32
    return %c0_i32, %c0_i32_0 : i32, i32
  }
  func.func @transform_11(%arg0: i32) -> (i32, i32) {
    %c0_i32 = arith.constant 0 : i32
    %c0_i32_0 = arith.constant 0 : i32
    %c0_i32_1 = arith.constant 0 : i32
    return %c0_i32, %c0_i32_0 : i32, i32
  }
  func.func @transform_12(%arg0: i32) -> (i32, i32) {
    %c0_i32 = arith.constant 0 : i32
    %c0_i32_0 = arith.constant 0 : i32
    %c0_i32_1 = arith.constant 0 : i32
    return %c0_i32, %c0_i32_0 : i32, i32
  }
  func.func @transform_13(%arg0: i32) -> (i32, i32) {
    %c0_i32 = arith.constant 0 : i32
    %c0_i32_0 = arith.constant 0 : i32
    %c0_i32_1 = arith.constant 0 : i32
    return %c0_i32, %c0_i32_0 : i32, i32
  }
  func.func @transform_14(%arg0: i32) -> (i32, i32) {
    %c0_i32 = arith.constant 0 : i32
    %c0_i32_0 = arith.constant 0 : i32
    %c0_i32_1 = arith.constant 0 : i32
    return %c0_i32, %c0_i32_0 : i32, i32
  }
  func.func @transform_15(%arg0: i32) -> (i32, i32) {
    %c0_i32 = arith.constant 0 : i32
    %c0_i32_0 = arith.constant 0 : i32
    %c0_i32_1 = arith.constant 0 : i32
    return %c0_i32, %c0_i32_0 : i32, i32
  }
  func.func @transform_16(%arg0: i32) -> (i32, i32, i32) {
    %c0_i32 = arith.constant 0 : i32
    %c0_i32_0 = arith.constant 0 : i32
    %c0_i32_1 = arith.constant 0 : i32
    return %arg0, %c0_i32, %c0_i32_0 : i32, i32, i32
  }
}

</mosaic_0001>

<llo_original>
// kernel: tpu_custom_call.1
$region0: #{tpu_custom_call.1}
  #allocation0 [shape = 'u32[]', space=smem, size = 0x4, offset = 0x4, fixed_abs, tag = 'smem constant byte address 0x4 - core index']
  #allocation1 [shape = 'u32[72,128]{1,0:T(1,128)}', space=vmem, size = 0x9000, scoped, tag = 'internal scratch']
  %s0 = inlined_call_operand.hbm [shape: f32[8,8,128], index: 0, kind: input, shape index: {}]
  %s1 = inlined_call_operand.hbm [shape: f32[8,1,128], index: 1, kind: input, shape index: {}]
  %s2 = inlined_call_operand.hbm [shape: f32[1,128], index: 2, kind: input, shape index: {}]
  %s3 = inlined_call_operand.hbm [shape: f32[1,128], index: 3, kind: input, shape index: {}]
  %s4 = inlined_call_operand.hbm [shape: f32[1,128], index: 4, kind: input, shape index: {}]
  %s5 = inlined_call_operand.hbm [shape: f32[1,128], index: 5, kind: input, shape index: {}]
  %s6 = inlined_call_operand.hbm [shape: f32[128,512], index: 6, kind: input, shape index: {}]
  %s7 = inlined_call_operand.vmem [shape: f32[1,512], index: 7, kind: input, shape index: {}]
  %s8 = inlined_call_operand.hbm [shape: bf16[128,384], index: 8, kind: input, shape index: {}]
  %s9 = inlined_call_operand.hbm [shape: f32[1,384], index: 9, kind: input, shape index: {}]
  %s10 = inlined_call_operand.hbm [shape: bf16[128,128], index: 10, kind: input, shape index: {}]
  %s11 = inlined_call_operand.vmem [shape: f32[1,128], index: 11, kind: input, shape index: {}]
  %s12 = inlined_call_operand.hbm [shape: bf16[128,512], index: 12, kind: input, shape index: {}]
  %s13 = inlined_call_operand.vmem [shape: f32[1,512], index: 13, kind: input, shape index: {}]
  %s14 = inlined_call_operand.hbm [shape: bf16[512,128], index: 14, kind: input, shape index: {}]
  %s15 = inlined_call_operand.vmem [shape: f32[1,128], index: 15, kind: input, shape index: {}]
  %s16 = inlined_call_operand.hbm [shape: f32[8,8,128], index: 16, kind: output, shape index: {}]
  %s17 = sld [smem:[#allocation0]]
  $region145: #{tpu_custom_call.1} parent=0
    _
  %s19 = ssub.s32 1, %s17
  %s20 = scalar_select 0, %s19, %s17
  $region1: #{tpu_custom_call.1} parent=0
    #allocation2 [shape = 'u8[16384]{0}', space=vmem, size = 0x4000, scoped, tag = 'input window, operand 0']
    #allocation3 [shape = 's32[2]{0}', space=sflag, size = 0x8, scoped, tag = 'scoped memory for tpu_custom_call.1']
    #allocation4 [shape = 's32[2]{0}', space=sflag, size = 0x8, scoped, tag = 'scoped memory for tpu_custom_call.1']
    #allocation5 [shape = 'u8[2048]{0}', space=vmem, size = 0x800, scoped, tag = 'input window, operand 1']
    #allocation6 [shape = 's32[2]{0}', space=sflag, size = 0x8, scoped, tag = 'scoped memory for tpu_custom_call.1']
    #allocation7 [shape = 'u8[512]{0}', space=vmem, size = 0x400, scoped, tag = 'input window, operand 2, single buffered']
    #allocation8 [shape = 'u8[512]{0}', space=vmem, size = 0x400, scoped, tag = 'input window, operand 3, single buffered']
    #allocation9 [shape = 's32[1]{0}', space=sflag, size = 0x4, scoped, tag = 'scoped memory for tpu_custom_call.1']
    #allocation10 [shape = 'u8[512]{0}', space=vmem, size = 0x400, scoped, tag = 'input window, operand 4, single buffered']
    #allocation11 [shape = 'u8[512]{0}', space=vmem, size = 0x400, scoped, tag = 'input window, operand 5, single buffered']
    #allocation12 [shape = 's32[1]{0}', space=sflag, size = 0x4, scoped, tag = 'scoped memory for tpu_custom_call.1']
    #allocation13 [shape = 'u8[262144]{0}', space=vmem, size = 0x40000, scoped, tag = 'input window, operand 6, single buffered']
    #allocation14 [shape = 'u8[98304]{0}', space=vmem, size = 0x18000, scoped, tag = 'input window, operand 8, single buffered']
    #allocation15 [shape = 's32[1]{0}', space=sflag, size = 0x4, scoped, tag = 'scoped memory for tpu_custom_call.1']
    #allocation16 [shape = 'u8[1536]{0}', space=vmem, size = 0x800, scoped, tag = 'input window, operand 9, single buffered']
    #allocation17 [shape = 'u8[32768]{0}', space=vmem, size = 0x8000, scoped, tag = 'input window, operand 10, single buffered']
    #allocation18 [shape = 's32[1]{0}', space=sflag, size = 0x4, scoped, tag = 'scoped memory for tpu_custom_call.1']
    #allocation19 [shape = 'u8[131072]{0}', space=vmem, size = 0x20000, scoped, tag = 'input window, operand 12, single buffered']
    #allocation20 [shape = 'u8[131072]{0}', space=vmem, size = 0x20000, scoped, tag = 'input window, operand 14, single buffered']
    #allocation21 [shape = 's32[1]{0}', space=sflag, size = 0x4, scoped, tag = 'scoped memory for tpu_custom_call.1']
    #allocation22 [shape = 'u8[16384]{0}', space=vmem, size = 0x4000, scoped, tag = 'output window, operand 0']
    %21 = vsyncpa [#allocation3], 0
    %s22 = scalar_lea.sflag [#allocation3], 1
    %23 = vsyncpa %s22, 0
    %24 = vsyncpa [#allocation6], 0
    %s25 = scalar_lea.sflag [#allocation6], 1
    %26 = vsyncpa %s25, 0
    %27 = vsyncpa [#allocation9], 0
    %28 = vsyncpa [#allocation12], 0
    %29 = vsyncpa [#allocation15], 0
    %30 = vsyncpa [#allocation18], 0
    %31 = vsyncpa [#allocation21], 0
    %32 = vsyncpa [#allocation4], 0
    %s33 = scalar_lea.sflag [#allocation4], 1
    %34 = vsyncpa %s33, 0
    loop: start=0, step=1, limit=6
    $region2: #{tpu_custom_call.1} parent=1 // loop_pre_header
      _
    $region3: #{tpu_custom_call.1} parent=1 // loop_header
      %s36 = sphi 0, %s40
      %p37 = scmp.ge.s32.totalorder %s36, 6
      %s46 = sphi 0, %s48
      %s49 = sphi 0, %s46
      %s50 = sphi 0, %s49
      %s66 = sphi 0, %s50
      %s72 = sphi 0, %s74
      %s75 = sphi 0, %s72
      %s76 = sphi 0, %s75
      %s92 = sphi 0, %s76
      %s96 = sphi 0, %s96
      %s98 = sphi 0, %s96
      %s99 = sphi 0, %s98
      %s113 = sphi 0, %s99
      %s117 = sphi 0, %s117
      %s119 = sphi 0, %s117
      %s120 = sphi 0, %s119
      %s134 = sphi 0, %s120
      %s138 = sphi 0, %s138
      %s140 = sphi 0, %s138
      %s141 = sphi 0, %s140
      %s155 = sphi 0, %s141
      %s159 = sphi 0, %s159
      %s161 = sphi 0, %s159
      %s162 = sphi 0, %s161
      %s176 = sphi 0, %s162
      %s180 = sphi 0, %s180
      %s182 = sphi 0, %s180
      %s183 = sphi 0, %s182
      %s197 = sphi 0, %s183
      %s201 = sphi 0, %s201
      %s203 = sphi 0, %s201
      %s204 = sphi 0, %s203
      %s218 = sphi 0, %s204
      %s222 = sphi 0, %s222
      %s224 = sphi 0, %s222
      %s225 = sphi 0, %s224
      %s239 = sphi 0, %s225
      %s243 = sphi 0, %s243
      %s245 = sphi 0, %s243
      %s246 = sphi 0, %s245
      %s260 = sphi 0, %s246
      %s264 = sphi 0, %s264
      %s266 = sphi 0, %s264
      %s267 = sphi 0, %s266
      %s281 = sphi 0, %s267
      %s285 = sphi 0, %s285
      %s287 = sphi 0, %s285
      %s288 = sphi 0, %s287
      %s302 = sphi 0, %s288
      %s306 = sphi 0, %s306
      %s308 = sphi 0, %s306
      %s309 = sphi 0, %s308
      %s323 = sphi 0, %s309
      %s327 = sphi 0, %s327
      %s329 = sphi 0, %s327
      %s330 = sphi 0, %s329
      %s344 = sphi 0, %s330
      %s348 = sphi 0, %s348
      %s350 = sphi 0, %s348
      %s351 = sphi 0, %s350
      %s365 = sphi 0, %s351
      %s369 = sphi 0, %s369
      %s371 = sphi 0, %s369
      %s372 = sphi 0, %s371
      %s386 = sphi 0, %s372
      %s392 = sphi 0, %s394
      %s395 = sphi 0, %s392
      %s396 = sphi 0, %s395
      %s412 = sphi 0, %s396
    $region4: #{tpu_custom_call.1} parent=1 // loop_header_branch
      %39 = sbr.rel (%p37) target = $region8
    $region5: #{tpu_custom_call.1} parent=1 // loop_body
      %s41 = ssub.s32 %s36, 1
      %s42 = ssub.s32 %s36, 2
      %s43 = sadd.s32 %s36, 1
      %s44 = ssub.s32 %s36, %s43
      %p45 = scmp.eq.s32.totalorder %s44, 0
      %s47 = sadd.s32 %s46, 1
      %s48 = scalar_select %p45, %s46, %s47
      %p51 = pneg %p45
      %p52 = scmp.eq.s32.totalorder %s36, 3
      %p53 = por %p51, %p52
      %p54 = scmp.ne.s32.totalorder %s46, %s49
      %p55 = scmp.eq.s32.totalorder %s36, 0
      %p56 = por %p54, %p55
      %p57 = scmp.ne.s32.totalorder %s46, %s49
      %p58 = scmp.eq.s32.totalorder %s41, 3
      %p59 = por %p57, %p58
      %p60 = scmp.ne.s32.totalorder %s49, %s50
      %p61 = scmp.eq.s32.totalorder %s41, 0
      %p62 = por %p60, %p61
      %p63 = scmp.ne.s32.totalorder %s49, %s50
      %p64 = scmp.eq.s32.totalorder %s42, 3
      %p65 = por %p63, %p64
      %p67 = scmp.ne.s32.totalorder %s50, %s66
      %p68 = scmp.eq.s32.totalorder %s42, 0
      %p69 = por %p67, %p68
      %s70 = ssub.s32 %s36, %s43
      %p71 = scmp.eq.s32.totalorder %s70, 0
      %s73 = sadd.s32 %s72, 1
      %s74 = scalar_select %p71, %s72, %s73
      %p77 = pneg %p71
      %p78 = scmp.eq.s32.totalorder %s36, 3
      %p79 = por %p77, %p78
      %p80 = scmp.ne.s32.totalorder %s72, %s75
      %p81 = scmp.eq.s32.totalorder %s36, 0
      %p82 = por %p80, %p81
      %p83 = scmp.ne.s32.totalorder %s72, %s75
      %p84 = scmp.eq.s32.totalorder %s41, 3
      %p85 = por %p83, %p84
      %p86 = scmp.ne.s32.totalorder %s75, %s76
      %p87 = scmp.eq.s32.totalorder %s41, 0
      %p88 = por %p86, %p87
      %p89 = scmp.ne.s32.totalorder %s75, %s76
      %p90 = scmp.eq.s32.totalorder %s42, 3
      %p91 = por %p89, %p90
      %p93 = scmp.ne.s32.totalorder %s76, %s92
      %p94 = scmp.eq.s32.totalorder %s42, 0
      %p95 = por %p93, %p94
      %s97 = sadd.s32 %s96, 1
      %p100 = scmp.eq.s32.totalorder %s36, 3
      %p101 = scmp.ne.s32.totalorder %s96, %s98
      %p102 = scmp.eq.s32.totalorder %s36, 0
      %p103 = por %p101, %p102
      %p104 = scmp.ne.s32.totalorder %s96, %s98
      %p105 = scmp.eq.s32.totalorder %s41, 3
      %p106 = por %p104, %p105
      %p107 = scmp.ne.s32.totalorder %s98, %s99
      %p108 = scmp.eq.s32.totalorder %s41, 0
      %p109 = por %p107, %p108
      %p110 = scmp.ne.s32.totalorder %s98, %s99
      %p111 = scmp.eq.s32.totalorder %s42, 3
      %p112 = por %p110, %p111
      %p114 = scmp.ne.s32.totalorder %s99, %s113
      %p115 = scmp.eq.s32.totalorder %s42, 0
      %p116 = por %p114, %p115
      %s118 = sadd.s32 %s117, 1
      %p121 = scmp.eq.s32.totalorder %s36, 3
      %p122 = scmp.ne.s32.totalorder %s117, %s119
      %p123 = scmp.eq.s32.totalorder %s36, 0
      %p124 = por %p122, %p123
      %p125 = scmp.ne.s32.totalorder %s117, %s119
      %p126 = scmp.eq.s32.totalorder %s41, 3
      %p127 = por %p125, %p126
      %p128 = scmp.ne.s32.totalorder %s119, %s120
      %p129 = scmp.eq.s32.totalorder %s41, 0
      %p130 = por %p128, %p129
      %p131 = scmp.ne.s32.totalorder %s119, %s120
      %p132 = scmp.eq.s32.totalorder %s42, 3
      %p133 = por %p131, %p132
      %p135 = scmp.ne.s32.totalorder %s120, %s134
      %p136 = scmp.eq.s32.totalorder %s42, 0
      %p137 = por %p135, %p136
      %s139 = sadd.s32 %s138, 1
      %p142 = scmp.eq.s32.totalorder %s36, 3
      %p143 = scmp.ne.s32.totalorder %s138, %s140
      %p144 = scmp.eq.s32.totalorder %s36, 0
      %p145 = por %p143, %p144
      %p146 = scmp.ne.s32.totalorder %s138, %s140
      %p147 = scmp.eq.s32.totalorder %s41, 3
      %p148 = por %p146, %p147
      %p149 = scmp.ne.s32.totalorder %s140, %s141
      %p150 = scmp.eq.s32.totalorder %s41, 0
      %p151 = por %p149, %p150
      %p152 = scmp.ne.s32.totalorder %s140, %s141
      %p153 = scmp.eq.s32.totalorder %s42, 3
      %p154 = por %p152, %p153
      %p156 = scmp.ne.s32.totalorder %s141, %s155
      %p157 = scmp.eq.s32.totalorder %s42, 0
      %p158 = por %p156, %p157
      %s160 = sadd.s32 %s159, 1
      %p163 = scmp.eq.s32.totalorder %s36, 3
      %p164 = scmp.ne.s32.totalorder %s159, %s161
      %p165 = scmp.eq.s32.totalorder %s36, 0
      %p166 = por %p164, %p165
      %p167 = scmp.ne.s32.totalorder %s159, %s161
      %p168 = scmp.eq.s32.totalorder %s41, 3
      %p169 = por %p167, %p168
      %p170 = scmp.ne.s32.totalorder %s161, %s162
      %p171 = scmp.eq.s32.totalorder %s41, 0
      %p172 = por %p170, %p171
      %p173 = scmp.ne.s32.totalorder %s161, %s162
      %p174 = scmp.eq.s32.totalorder %s42, 3
      %p175 = por %p173, %p174
      %p177 = scmp.ne.s32.totalorder %s162, %s176
      %p178 = scmp.eq.s32.totalorder %s42, 0
      %p179 = por %p177, %p178
      %s181 = sadd.s32 %s180, 1
      %p184 = scmp.eq.s32.totalorder %s36, 3
      %p185 = scmp.ne.s32.totalorder %s180, %s182
      %p186 = scmp.eq.s32.totalorder %s36, 0
      %p187 = por %p185, %p186
      %p188 = scmp.ne.s32.totalorder %s180, %s182
      %p189 = scmp.eq.s32.totalorder %s41, 3
      %p190 = por %p188, %p189
      %p191 = scmp.ne.s32.totalorder %s182, %s183
      %p192 = scmp.eq.s32.totalorder %s41, 0
      %p193 = por %p191, %p192
      %p194 = scmp.ne.s32.totalorder %s182, %s183
      %p195 = scmp.eq.s32.totalorder %s42, 3
      %p196 = por %p194, %p195
      %p198 = scmp.ne.s32.totalorder %s183, %s197
      %p199 = scmp.eq.s32.totalorder %s42, 0
      %p200 = por %p198, %p199
      %s202 = sadd.s32 %s201, 1
      %p205 = scmp.eq.s32.totalorder %s36, 3
      %p206 = scmp.ne.s32.totalorder %s201, %s203
      %p207 = scmp.eq.s32.totalorder %s36, 0
      %p208 = por %p206, %p207
      %p209 = scmp.ne.s32.totalorder %s201, %s203
      %p210 = scmp.eq.s32.totalorder %s41, 3
      %p211 = por %p209, %p210
      %p212 = scmp.ne.s32.totalorder %s203, %s204
      %p213 = scmp.eq.s32.totalorder %s41, 0
      %p214 = por %p212, %p213
      %p215 = scmp.ne.s32.totalorder %s203, %s204
      %p216 = scmp.eq.s32.totalorder %s42, 3
      %p217 = por %p215, %p216
      %p219 = scmp.ne.s32.totalorder %s204, %s218
      %p220 = scmp.eq.s32.totalorder %s42, 0
      %p221 = por %p219, %p220
      %s223 = sadd.s32 %s222, 1
      %p226 = scmp.eq.s32.totalorder %s36, 3
      %p227 = scmp.ne.s32.totalorder %s222, %s224
      %p228 = scmp.eq.s32.totalorder %s36, 0
      %p229 = por %p227, %p228
      %p230 = scmp.ne.s32.totalorder %s222, %s224
      %p231 = scmp.eq.s32.totalorder %s41, 3
      %p232 = por %p230, %p231
      %p233 = scmp.ne.s32.totalorder %s224, %s225
      %p234 = scmp.eq.s32.totalorder %s41, 0
      %p235 = por %p233, %p234
      %p236 = scmp.ne.s32.totalorder %s224, %s225
      %p237 = scmp.eq.s32.totalorder %s42, 3
      %p238 = por %p236, %p237
      %p240 = scmp.ne.s32.totalorder %s225, %s239
      %p241 = scmp.eq.s32.totalorder %s42, 0
      %p242 = por %p240, %p241
      %s244 = sadd.s32 %s243, 1
      %p247 = scmp.eq.s32.totalorder %s36, 3
      %p248 = scmp.ne.s32.totalorder %s243, %s245
      %p249 = scmp.eq.s32.totalorder %s36, 0
      %p250 = por %p248, %p249
      %p251 = scmp.ne.s32.totalorder %s243, %s245
      %p252 = scmp.eq.s32.totalorder %s41, 3
      %p253 = por %p251, %p252
      %p254 = scmp.ne.s32.totalorder %s245, %s246
      %p255 = scmp.eq.s32.totalorder %s41, 0
      %p256 = por %p254, %p255
      %p257 = scmp.ne.s32.totalorder %s245, %s246
      %p258 = scmp.eq.s32.totalorder %s42, 3
      %p259 = por %p257, %p258
      %p261 = scmp.ne.s32.totalorder %s246, %s260
      %p262 = scmp.eq.s32.totalorder %s42, 0
      %p263 = por %p261, %p262
      %s265 = sadd.s32 %s264, 1
      %p268 = scmp.eq.s32.totalorder %s36, 3
      %p269 = scmp.ne.s32.totalorder %s264, %s266
      %p270 = scmp.eq.s32.totalorder %s36, 0
      %p271 = por %p269, %p270
      %p272 = scmp.ne.s32.totalorder %s264, %s266
      %p273 = scmp.eq.s32.totalorder %s41, 3
      %p274 = por %p272, %p273
      %p275 = scmp.ne.s32.totalorder %s266, %s267
      %p276 = scmp.eq.s32.totalorder %s41, 0
      %p277 = por %p275, %p276
      %p278 = scmp.ne.s32.totalorder %s266, %s267
      %p279 = scmp.eq.s32.totalorder %s42, 3
      %p280 = por %p278, %p279
      %p282 = scmp.ne.s32.totalorder %s267, %s281
      %p283 = scmp.eq.s32.totalorder %s42, 0
      %p284 = por %p282, %p283
      %s286 = sadd.s32 %s285, 1
      %p289 = scmp.eq.s32.totalorder %s36, 3
      %p290 = scmp.ne.s32.totalorder %s285, %s287
      %p291 = scmp.eq.s32.totalorder %s36, 0
      %p292 = por %p290, %p291
      %p293 = scmp.ne.s32.totalorder %s285, %s287
      %p294 = scmp.eq.s32.totalorder %s41, 3
      %p295 = por %p293, %p294
      %p296 = scmp.ne.s32.totalorder %s287, %s288
      %p297 = scmp.eq.s32.totalorder %s41, 0
      %p298 = por %p296, %p297
      %p299 = scmp.ne.s32.totalorder %s287, %s288
      %p300 = scmp.eq.s32.totalorder %s42, 3
      %p301 = por %p299, %p300
      %p303 = scmp.ne.s32.totalorder %s288, %s302
      %p304 = scmp.eq.s32.totalorder %s42, 0
      %p305 = por %p303, %p304
      %s307 = sadd.s32 %s306, 1
      %p310 = scmp.eq.s32.totalorder %s36, 3
      %p311 = scmp.ne.s32.totalorder %s306, %s308
      %p312 = scmp.eq.s32.totalorder %s36, 0
      %p313 = por %p311, %p312
      %p314 = scmp.ne.s32.totalorder %s306, %s308
      %p315 = scmp.eq.s32.totalorder %s41, 3
      %p316 = por %p314, %p315
      %p317 = scmp.ne.s32.totalorder %s308, %s309
      %p318 = scmp.eq.s32.totalorder %s41, 0
      %p319 = por %p317, %p318
      %p320 = scmp.ne.s32.totalorder %s308, %s309
      %p321 = scmp.eq.s32.totalorder %s42, 3
      %p322 = por %p320, %p321
      %p324 = scmp.ne.s32.totalorder %s309, %s323
      %p325 = scmp.eq.s32.totalorder %s42, 0
      %p326 = por %p324, %p325
      %s328 = sadd.s32 %s327, 1
      %p331 = scmp.eq.s32.totalorder %s36, 3
      %p332 = scmp.ne.s32.totalorder %s327, %s329
      %p333 = scmp.eq.s32.totalorder %s36, 0
      %p334 = por %p332, %p333
      %p335 = scmp.ne.s32.totalorder %s327, %s329
      %p336 = scmp.eq.s32.totalorder %s41, 3
      %p337 = por %p335, %p336
      %p338 = scmp.ne.s32.totalorder %s329, %s330
      %p339 = scmp.eq.s32.totalorder %s41, 0
      %p340 = por %p338, %p339
      %p341 = scmp.ne.s32.totalorder %s329, %s330
      %p342 = scmp.eq.s32.totalorder %s42, 3
      %p343 = por %p341, %p342
      %p345 = scmp.ne.s32.totalorder %s330, %s344
      %p346 = scmp.eq.s32.totalorder %s42, 0
      %p347 = por %p345, %p346
      %s349 = sadd.s32 %s348, 1
      %p352 = scmp.eq.s32.totalorder %s36, 3
      %p353 = scmp.ne.s32.totalorder %s348, %s350
      %p354 = scmp.eq.s32.totalorder %s36, 0
      %p355 = por %p353, %p354
      %p356 = scmp.ne.s32.totalorder %s348, %s350
      %p357 = scmp.eq.s32.totalorder %s41, 3
      %p358 = por %p356, %p357
      %p359 = scmp.ne.s32.totalorder %s350, %s351
      %p360 = scmp.eq.s32.totalorder %s41, 0
      %p361 = por %p359, %p360
      %p362 = scmp.ne.s32.totalorder %s350, %s351
      %p363 = scmp.eq.s32.totalorder %s42, 3
      %p364 = por %p362, %p363
      %p366 = scmp.ne.s32.totalorder %s351, %s365
      %p367 = scmp.eq.s32.totalorder %s42, 0
      %p368 = por %p366, %p367
      %s370 = sadd.s32 %s369, 1
      %p373 = scmp.eq.s32.totalorder %s36, 3
      %p374 = scmp.ne.s32.totalorder %s369, %s371
      %p375 = scmp.eq.s32.totalorder %s36, 0
      %p376 = por %p374, %p375
      %p377 = scmp.ne.s32.totalorder %s369, %s371
      %p378 = scmp.eq.s32.totalorder %s41, 3
      %p379 = por %p377, %p378
      %p380 = scmp.ne.s32.totalorder %s371, %s372
      %p381 = scmp.eq.s32.totalorder %s41, 0
      %p382 = por %p380, %p381
      %p383 = scmp.ne.s32.totalorder %s371, %s372
      %p384 = scmp.eq.s32.totalorder %s42, 3
      %p385 = por %p383, %p384
      %p387 = scmp.ne.s32.totalorder %s372, %s386
      %p388 = scmp.eq.s32.totalorder %s42, 0
      %p389 = por %p387, %p388
      %s390 = ssub.s32 %s36, %s43
      %p391 = scmp.eq.s32.totalorder %s390, 0
      %s393 = sadd.s32 %s392, 1
      %s394 = scalar_select %p391, %s392, %s393
      %p397 = pneg %p391
      %p398 = scmp.eq.s32.totalorder %s36, 3
      %p399 = por %p397, %p398
      %p400 = scmp.ne.s32.totalorder %s392, %s395
      %p401 = scmp.eq.s32.totalorder %s36, 0
      %p402 = por %p400, %p401
      %p403 = scmp.ne.s32.totalorder %s392, %s395
      %p404 = scmp.eq.s32.totalorder %s41, 3
      %p405 = por %p403, %p404
      %p406 = scmp.ne.s32.totalorder %s395, %s396
      %p407 = scmp.eq.s32.totalorder %s41, 0
      %p408 = por %p406, %p407
      %p409 = scmp.ne.s32.totalorder %s395, %s396
      %p410 = scmp.eq.s32.totalorder %s42, 3
      %p411 = por %p409, %p410
      %p413 = scmp.ne.s32.totalorder %s396, %s412
      %p414 = scmp.eq.s32.totalorder %s42, 0
      %p415 = por %p413, %p414
      %p416 = scmp.le.s32.totalorder 1, %s36
      %p417 = scmp.lt.s32.totalorder %s36, 5
      %p418 = pnand %p416, %p417
      %p419 = pneg %p418
      // Predicated region
      $region9: #{tpu_custom_call.1} parent=5 // pred_check
        _
      $region10: #{tpu_custom_call.1} parent=5 // pred_check_branch
        %421 = sbr.rel (%p418) target = $region12
      $region11: #{tpu_custom_call.1} parent=5 // pred_region
        %s422 = ssub.s32 %s36, 1
        // Predicated region
        $region13: #{tpu_custom_call.1} parent=11 // pred_check
          %p423 = pneg %p109
        $region14: #{tpu_custom_call.1} parent=11 // pred_check_branch
          %425 = sbr.rel (%p423) target = $region16
        $region15: #{tpu_custom_call.1} parent=11 // pred_region
          %427 = vsyncadd [#allocation6], 0
          %s429 = sshll.u32 %s2, 4
          %s430 = int_to_ptr.hbm [resolvable:$true] %s429
          %s431 = sshll.u32 [#allocation7], 4
          %s432 = int_to_ptr.vmem [resolvable:$true] %s431
          %434 = dma.hbm_to_vmem [thread:$0]  %s430, 16, %s432, [#allocation6]
        $region16: #{tpu_custom_call.1} parent=11 // pred_fallthru
          _
        // Predicated region
        $region17: #{tpu_custom_call.1} parent=11 // pred_check
          %p435 = pneg %p130
        $region18: #{tpu_custom_call.1} parent=11 // pred_check_branch
          %437 = sbr.rel (%p435) target = $region20
        $region19: #{tpu_custom_call.1} parent=11 // pred_region
          %439 = vsyncadd [#allocation9], 0
          %s441 = sshll.u32 %s3, 4
          %s442 = int_to_ptr.hbm [resolvable:$true] %s441
          %s443 = sshll.u32 [#allocation8], 4
          %s444 = int_to_ptr.vmem [resolvable:$true] %s443
          %446 = dma.hbm_to_vmem [thread:$0]  %s442, 16, %s444, [#allocation9]
        $region20: #{tpu_custom_call.1} parent=11 // pred_fallthru
          _
        // Predicated region
        $region21: #{tpu_custom_call.1} parent=11 // pred_check
          %p447 = pneg %p151
        $region22: #{tpu_custom_call.1} parent=11 // pred_check_branch
          %449 = sbr.rel (%p447) target = $region24
        $region23: #{tpu_custom_call.1} parent=11 // pred_region
          %451 = vsyncadd [#allocation9], 0
          %s453 = sshll.u32 %s4, 4
          %s454 = int_to_ptr.hbm [resolvable:$true] %s453
          %s455 = sshll.u32 [#allocation10], 4
          %s456 = int_to_ptr.vmem [resolvable:$true] %s455
          %458 = dma.hbm_to_vmem [thread:$0]  %s454, 16, %s456, [#allocation9]
        $region24: #{tpu_custom_call.1} parent=11 // pred_fallthru
          _
        // Predicated region
        $region25: #{tpu_custom_call.1} parent=11 // pred_check
          %p459 = pneg %p172
        $region26: #{tpu_custom_call.1} parent=11 // pred_check_branch
          %461 = sbr.rel (%p459) target = $region28
        $region27: #{tpu_custom_call.1} parent=11 // pred_region
          %463 = vsyncadd [#allocation12], 0
          %s465 = sshll.u32 %s5, 4
          %s466 = int_to_ptr.hbm [resolvable:$true] %s465
          %s467 = sshll.u32 [#allocation11], 4
          %s468 = int_to_ptr.vmem [resolvable:$true] %s467
          %470 = dma.hbm_to_vmem [thread:$0]  %s466, 16, %s468, [#allocation12]
        $region28: #{tpu_custom_call.1} parent=11 // pred_fallthru
          _
        // Predicated region
        $region29: #{tpu_custom_call.1} parent=11 // pred_check
          %p471 = pneg %p193
        $region30: #{tpu_custom_call.1} parent=11 // pred_check_branch
          %473 = sbr.rel (%p471) target = $region32
        $region31: #{tpu_custom_call.1} parent=11 // pred_region
          %475 = vsyncadd [#allocation12], 0
          %s476 = sshll.u32 %s6, 4
          %s477 = int_to_ptr.hbm [resolvable:$true] %s476
          %s478 = sshll.u32 [#allocation13], 4
          %s479 = int_to_ptr.vmem [resolvable:$true] %s478
          %484 = dma.hbm_to_vmem [thread:$0]  %s477, 8192, %s479, [#allocation12], 512, 512, 32
        $region32: #{tpu_custom_call.1} parent=11 // pred_fallthru
          _
        // Predicated region
        $region33: #{tpu_custom_call.1} parent=11 // pred_check
          %p485 = pneg %p214
        $region34: #{tpu_custom_call.1} parent=11 // pred_check_branch
          %487 = sbr.rel (%p485) target = $region36
        $region35: #{tpu_custom_call.1} parent=11 // pred_region
          _
        $region36: #{tpu_custom_call.1} parent=11 // pred_fallthru
          _
        // Predicated region
        $region37: #{tpu_custom_call.1} parent=11 // pred_check
          %p488 = pneg %p235
        $region38: #{tpu_custom_call.1} parent=11 // pred_check_branch
          %490 = sbr.rel (%p488) target = $region40
        $region39: #{tpu_custom_call.1} parent=11 // pred_region
          %492 = vsyncadd [#allocation15], 0
          %s493 = sshll.u32 %s8, 4
          %s494 = int_to_ptr.hbm [resolvable:$true] %s493
          %s495 = sshll.u32 [#allocation14], 4
          %s496 = int_to_ptr.vmem [resolvable:$true] %s495
          %501 = dma.hbm_to_vmem [thread:$0]  %s494, 3072, %s496, [#allocation15], 192, 192, 12
        $region40: #{tpu_custom_call.1} parent=11 // pred_fallthru
          _
        // Predicated region
        $region41: #{tpu_custom_call.1} parent=11 // pred_check
          %p502 = pneg %p256
        $region42: #{tpu_custom_call.1} parent=11 // pred_check_branch
          %504 = sbr.rel (%p502) target = $region44
        $region43: #{tpu_custom_call.1} parent=11 // pred_region
          %506 = vsyncadd [#allocation15], 0
          %s508 = sshll.u32 %s9, 4
          %s509 = int_to_ptr.hbm [resolvable:$true] %s508
          %s510 = sshll.u32 [#allocation16], 4
          %s511 = int_to_ptr.vmem [resolvable:$true] %s510
          %513 = dma.hbm_to_vmem [thread:$0]  %s509, 48, %s511, [#allocation15]
        $region44: #{tpu_custom_call.1} parent=11 // pred_fallthru
          _
        // Predicated region
        $region45: #{tpu_custom_call.1} parent=11 // pred_check
          %p514 = pneg %p277
        $region46: #{tpu_custom_call.1} parent=11 // pred_check_branch
          %516 = sbr.rel (%p514) target = $region48
        $region47: #{tpu_custom_call.1} parent=11 // pred_region
          %518 = vsyncadd [#allocation18], 0
          %s519 = sshll.u32 %s10, 4
          %s520 = int_to_ptr.hbm [resolvable:$true] %s519
          %s521 = sshll.u32 [#allocation17], 4
          %s522 = int_to_ptr.vmem [resolvable:$true] %s521
          %527 = dma.hbm_to_vmem [thread:$0]  %s520, 1024, %s522, [#allocation18], 64, 64, 4
        $region48: #{tpu_custom_call.1} parent=11 // pred_fallthru
          _
        // Predicated region
        $region49: #{tpu_custom_call.1} parent=11 // pred_check
          %p528 = pneg %p298
        $region50: #{tpu_custom_call.1} parent=11 // pred_check_branch
          %530 = sbr.rel (%p528) target = $region52
        $region51: #{tpu_custom_call.1} parent=11 // pred_region
          _
        $region52: #{tpu_custom_call.1} parent=11 // pred_fallthru
          _
        // Predicated region
        $region53: #{tpu_custom_call.1} parent=11 // pred_check
          %p531 = pneg %p319
        $region54: #{tpu_custom_call.1} parent=11 // pred_check_branch
          %533 = sbr.rel (%p531) target = $region56
        $region55: #{tpu_custom_call.1} parent=11 // pred_region
          %535 = vsyncadd [#allocation18], 0
          %s536 = sshll.u32 %s12, 4
          %s537 = int_to_ptr.hbm [resolvable:$true] %s536
          %s538 = sshll.u32 [#allocation19], 4
          %s539 = int_to_ptr.vmem [resolvable:$true] %s538
          %544 = dma.hbm_to_vmem [thread:$0]  %s537, 4096, %s539, [#allocation18], 256, 256, 16
        $region56: #{tpu_custom_call.1} parent=11 // pred_fallthru
          _
        // Predicated region
        $region57: #{tpu_custom_call.1} parent=11 // pred_check
          %p545 = pneg %p340
        $region58: #{tpu_custom_call.1} parent=11 // pred_check_branch
          %547 = sbr.rel (%p545) target = $region60
        $region59: #{tpu_custom_call.1} parent=11 // pred_region
          _
        $region60: #{tpu_custom_call.1} parent=11 // pred_fallthru
          _
        // Predicated region
        $region61: #{tpu_custom_call.1} parent=11 // pred_check
          %p548 = pneg %p361
        $region62: #{tpu_custom_call.1} parent=11 // pred_check_branch
          %550 = sbr.rel (%p548) target = $region64
        $region63: #{tpu_custom_call.1} parent=11 // pred_region
          %552 = vsyncadd [#allocation21], 0
          %s553 = sshll.u32 %s14, 4
          %s554 = int_to_ptr.hbm [resolvable:$true] %s553
          %s555 = sshll.u32 [#allocation20], 4
          %s556 = int_to_ptr.vmem [resolvable:$true] %s555
          %561 = dma.hbm_to_vmem [thread:$0]  %s554, 4096, %s556, [#allocation21], 64, 64, 4
        $region64: #{tpu_custom_call.1} parent=11 // pred_fallthru
          _
        // Predicated region
        $region65: #{tpu_custom_call.1} parent=11 // pred_check
          %p562 = pneg %p382
        $region66: #{tpu_custom_call.1} parent=11 // pred_check_branch
          %564 = sbr.rel (%p562) target = $region68
        $region67: #{tpu_custom_call.1} parent=11 // pred_region
          _
        $region68: #{tpu_custom_call.1} parent=11 // pred_fallthru
          _
      $region12: #{tpu_custom_call.1} parent=5 // pred_fallthru
        _
      %p565 = scmp.lt.s32.totalorder %s36, 4
      // Predicated region
      $region69: #{tpu_custom_call.1} parent=5 // pred_check
        %p566 = pneg %p565
      $region70: #{tpu_custom_call.1} parent=5 // pred_check_branch
        %568 = sbr.rel (%p566) target = $region72
      $region71: #{tpu_custom_call.1} parent=5 // pred_region
        // Predicated region
        $region73: #{tpu_custom_call.1} parent=71 // pred_check
          %p569 = pneg %p56
        $region74: #{tpu_custom_call.1} parent=71 // pred_check_branch
          %571 = sbr.rel (%p569) target = $region76
        $region75: #{tpu_custom_call.1} parent=71 // pred_region
          %s572 = sand.u32 %s46, 1
          %s573 = scalar_lea.sflag [#allocation3], %s572
          %s574 = sand.u32 %s46, 1
          %s575 = smul.addr %s574, 16
          %s576 = scalar_lea.vmem [#allocation2], %s575
          %s577 = smul.u32 2, %s36
          %579 = vsyncadd %s573, 0
          %s580 = smul.addr %s577, 8
          %s581 = scalar_lea.hbm %s0, %s580
          %s582 = sshll.u32 %s581, 4
          %s583 = int_to_ptr.hbm [resolvable:$true] %s582
          %s584 = sshll.u32 %s576, 4
          %s585 = int_to_ptr.vmem [resolvable:$true] %s584
          %590 = dma.hbm_to_vmem [thread:$0]  %s583, 256, %s585, %s573, 128, 128, 8
        $region76: #{tpu_custom_call.1} parent=71 // pred_fallthru
          _
        // Predicated region
        $region77: #{tpu_custom_call.1} parent=71 // pred_check
          %p591 = pneg %p82
        $region78: #{tpu_custom_call.1} parent=71 // pred_check_branch
          %593 = sbr.rel (%p591) target = $region80
        $region79: #{tpu_custom_call.1} parent=71 // pred_region
          %s594 = sand.u32 %s36, 1
          %s595 = scalar_lea.sflag [#allocation6], %s594
          %s596 = sand.u32 %s72, 1
          %s597 = smul.addr %s596, 2
          %s598 = scalar_lea.vmem [#allocation5], %s597
          %s599 = smul.u32 2, %s36
          %601 = vsyncadd %s595, 0
          %s602 = scalar_lea.hbm %s1, %s599
          %s603 = sshll.u32 %s602, 4
          %s604 = int_to_ptr.hbm [resolvable:$true] %s603
          %s605 = sshll.u32 %s598, 4
          %s606 = int_to_ptr.vmem [resolvable:$true] %s605
          %611 = dma.hbm_to_vmem [thread:$0]  %s604, 32, %s606, %s595, 16, 16, 1
        $region80: #{tpu_custom_call.1} parent=71 // pred_fallthru
          _
      $region72: #{tpu_custom_call.1} parent=5 // pred_fallthru
        _
      %p612 = scmp.le.s32.totalorder 1, %s36
      %p613 = scmp.lt.s32.totalorder %s36, 5
      %p614 = pnand %p612, %p613
      %p615 = pneg %p614
      // Predicated region
      $region81: #{tpu_custom_call.1} parent=5 // pred_check
        _
      $region82: #{tpu_custom_call.1} parent=5 // pred_check_branch
        %617 = sbr.rel (%p614) target = $region84
      $region83: #{tpu_custom_call.1} parent=5 // pred_region
        %s618 = ssub.s32 %s36, 1
        %s619 = sand.u32 %s49, 1
        %s620 = scalar_lea.sflag [#allocation3], %s619
        %s621 = sand.u32 %s49, 1
        %s622 = smul.addr %s621, 16
        %s623 = scalar_lea.vmem [#allocation2], %s622
        // Predicated region
        $region85: #{tpu_custom_call.1} parent=83 // pred_check
          %p624 = pneg %p62
        $region86: #{tpu_custom_call.1} parent=83 // pred_check_branch
          %626 = sbr.rel (%p624) target = $region88
        $region87: #{tpu_custom_call.1} parent=83 // pred_region
          %628 = dma.done %s620, 256
        $region88: #{tpu_custom_call.1} parent=83 // pred_fallthru
          _
        %s629 = sand.u32 %s41, 1
        %s630 = scalar_lea.sflag [#allocation6], %s629
        %s631 = sand.u32 %s75, 1
        %s632 = smul.addr %s631, 2
        %s633 = scalar_lea.vmem [#allocation5], %s632
        // Predicated region
        $region89: #{tpu_custom_call.1} parent=83 // pred_check
          %p634 = pneg %p88
        $region90: #{tpu_custom_call.1} parent=83 // pred_check_branch
          %636 = sbr.rel (%p634) target = $region92
        $region91: #{tpu_custom_call.1} parent=83 // pred_region
          %638 = dma.done %s630, 32
        $region92: #{tpu_custom_call.1} parent=83 // pred_fallthru
          _
        // Predicated region
        $region93: #{tpu_custom_call.1} parent=83 // pred_check
          %p639 = pneg %p109
        $region94: #{tpu_custom_call.1} parent=83 // pred_check_branch
          %641 = sbr.rel (%p639) target = $region96
        $region95: #{tpu_custom_call.1} parent=83 // pred_region
          %643 = dma.done [#allocation6], 16
        $region96: #{tpu_custom_call.1} parent=83 // pred_fallthru
          _
        // Predicated region
        $region97: #{tpu_custom_call.1} parent=83 // pred_check
          %p644 = pneg %p130
        $region98: #{tpu_custom_call.1} parent=83 // pred_check_branch
          %646 = sbr.rel (%p644) target = $region100
        $region99: #{tpu_custom_call.1} parent=83 // pred_region
          %648 = dma.done [#allocation9], 16
        $region100: #{tpu_custom_call.1} parent=83 // pred_fallthru
          _
        // Predicated region
        $region101: #{tpu_custom_call.1} parent=83 // pred_check
          %p649 = pneg %p151
        $region102: #{tpu_custom_call.1} parent=83 // pred_check_branch
          %651 = sbr.rel (%p649) target = $region104
        $region103: #{tpu_custom_call.1} parent=83 // pred_region
          %653 = dma.done [#allocation9], 16
        $region104: #{tpu_custom_call.1} parent=83 // pred_fallthru
          _
        // Predicated region
        $region105: #{tpu_custom_call.1} parent=83 // pred_check
          %p654 = pneg %p172
        $region106: #{tpu_custom_call.1} parent=83 // pred_check_branch
          %656 = sbr.rel (%p654) target = $region108
        $region107: #{tpu_custom_call.1} parent=83 // pred_region
          %658 = dma.done [#allocation12], 16
        $region108: #{tpu_custom_call.1} parent=83 // pred_fallthru
          _
        // Predicated region
        $region109: #{tpu_custom_call.1} parent=83 // pred_check
          %p659 = pneg %p193
        $region110: #{tpu_custom_call.1} parent=83 // pred_check_branch
          %661 = sbr.rel (%p659) target = $region112
        $region111: #{tpu_custom_call.1} parent=83 // pred_region
          %663 = dma.done [#allocation12], 8192
        $region112: #{tpu_custom_call.1} parent=83 // pred_fallthru
          _
        // Predicated region
        $region113: #{tpu_custom_call.1} parent=83 // pred_check
          %p664 = pneg %p235
        $region114: #{tpu_custom_call.1} parent=83 // pred_check_branch
          %666 = sbr.rel (%p664) target = $region116
        $region115: #{tpu_custom_call.1} parent=83 // pred_region
          %668 = dma.done [#allocation15], 3072
        $region116: #{tpu_custom_call.1} parent=83 // pred_fallthru
          _
        // Predicated region
        $region117: #{tpu_custom_call.1} parent=83 // pred_check
          %p669 = pneg %p256
        $region118: #{tpu_custom_call.1} parent=83 // pred_check_branch
          %671 = sbr.rel (%p669) target = $region120
        $region119: #{tpu_custom_call.1} parent=83 // pred_region
          %673 = dma.done [#allocation15], 48
        $region120: #{tpu_custom_call.1} parent=83 // pred_fallthru
          _
        // Predicated region
        $region121: #{tpu_custom_call.1} parent=83 // pred_check
          %p674 = pneg %p277
        $region122: #{tpu_custom_call.1} parent=83 // pred_check_branch
          %676 = sbr.rel (%p674) target = $region124
        $region123: #{tpu_custom_call.1} parent=83 // pred_region
          %678 = dma.done [#allocation18], 1024
        $region124: #{tpu_custom_call.1} parent=83 // pred_fallthru
          _
        // Predicated region
        $region125: #{tpu_custom_call.1} parent=83 // pred_check
          %p679 = pneg %p319
        $region126: #{tpu_custom_call.1} parent=83 // pred_check_branch
          %681 = sbr.rel (%p679) target = $region128
        $region127: #{tpu_custom_call.1} parent=83 // pred_region
          %683 = dma.done [#allocation18], 4096
        $region128: #{tpu_custom_call.1} parent=83 // pred_fallthru
          _
        // Predicated region
        $region129: #{tpu_custom_call.1} parent=83 // pred_check
          %p684 = pneg %p361
        $region130: #{tpu_custom_call.1} parent=83 // pred_check_branch
          %686 = sbr.rel (%p684) target = $region132
        $region131: #{tpu_custom_call.1} parent=83 // pred_region
          %688 = dma.done [#allocation21], 4096
        $region132: #{tpu_custom_call.1} parent=83 // pred_fallthru
          _
        %s689 = sand.u32 %s49, 1
        %s690 = scalar_lea.sflag [#allocation3], %s689
        %s691 = sand.u32 %s49, 1
        %s692 = smul.addr %s691, 16
        %s693 = scalar_lea.vmem [#allocation2], %s692
        %p694 = pneg %p62
        %p695 = pneg %p59
        %s696 = sand.u32 %s41, 1
        %s697 = scalar_lea.sflag [#allocation6], %s696
        %s698 = sand.u32 %s75, 1
        %s699 = smul.addr %s698, 2
        %s700 = scalar_lea.vmem [#allocation5], %s699
        %p701 = pneg %p88
        %p702 = pneg %p85
        %p703 = pneg %p109
        %p704 = pneg %p106
        %p705 = pneg %p130
        %p706 = pneg %p127
        %p707 = pneg %p151
        %p708 = pneg %p148
        %p709 = pneg %p172
        %p710 = pneg %p169
        %p711 = pneg %p193
        %p712 = pneg %p190
        %p713 = pneg %p214
        %p714 = pneg %p211
        %p715 = pneg %p235
        %p716 = pneg %p232
        %p717 = pneg %p256
        %p718 = pneg %p253
        %p719 = pneg %p277
        %p720 = pneg %p274
        %p721 = pneg %p298
        %p722 = pneg %p295
        %p723 = pneg %p319
        %p724 = pneg %p316
        %p725 = pneg %p340
        %p726 = pneg %p337
        %p727 = pneg %p361
        %p728 = pneg %p358
        %p729 = pneg %p382
        %p730 = pneg %p379
        %p731 = pneg %p408
        %p732 = pneg %p405
        %s733 = sand.u32 %s395, 1
        %s734 = scalar_lea.sflag [#allocation4], %s733
        %s735 = sand.u32 %s395, 1
        %s736 = smul.addr %s735, 16
        %s737 = scalar_lea.vmem [#allocation22], %s736
        %s738 = smul.u32 2, %s41
        %s739 = smul.u32 2, %s41
        %s740 = smul.u32 2, %s41
        %v741 = vld [vmem:[%s623] sm:$0xff]
        %v742 = vld [vmem:[%s623 + $0x8] sm:$0xff]
        %v743 = vld [vmem:[%s633] sm:$0x1]
        %v744 = vld [vmem:[%s633 + $0x1] sm:$0x1]
        %v745 = vld [vmem:[#allocation13] sm:$0xff]
        %v746 = vld [vmem:[#allocation13 + $0x8] sm:$0xff]
        %v747 = vld [vmem:[#allocation13 + $0x10] sm:$0xff]
        %v748 = vld [vmem:[#allocation13 + $0x18] sm:$0xff]
        %v749 = vld [vmem:[#allocation13 + $0x20] sm:$0xff]
        %v750 = vld [vmem:[#allocation13 + $0x28] sm:$0xff]
        %v751 = vld [vmem:[#allocation13 + $0x30] sm:$0xff]
        %v752 = vld [vmem:[#allocation13 + $0x38] sm:$0xff]
        %v753 = vld [vmem:[#allocation13 + $0x40] sm:$0xff]
        %v754 = vld [vmem:[#allocation13 + $0x48] sm:$0xff]
        %v755 = vld [vmem:[#allocation13 + $0x50] sm:$0xff]
        %v756 = vld [vmem:[#allocation13 + $0x58] sm:$0xff]
        %v757 = vld [vmem:[#allocation13 + $0x60] sm:$0xff]
        %v758 = vld [vmem:[#allocation13 + $0x68] sm:$0xff]
        %v759 = vld [vmem:[#allocation13 + $0x70] sm:$0xff]
        %v760 = vld [vmem:[#allocation13 + $0x78] sm:$0xff]
        %v761 = vld [vmem:[#allocation13 + $0x80] sm:$0xff]
        %v762 = vld [vmem:[#allocation13 + $0x88] sm:$0xff]
        %v763 = vld [vmem:[#allocation13 + $0x90] sm:$0xff]
        %v764 = vld [vmem:[#allocation13 + $0x98] sm:$0xff]
        %v765 = vld [vmem:[#allocation13 + $0xa0] sm:$0xff]
        %v766 = vld [vmem:[#allocation13 + $0xa8] sm:$0xff]
        %v767 = vld [vmem:[#allocation13 + $0xb0] sm:$0xff]
        %v768 = vld [vmem:[#allocation13 + $0xb8] sm:$0xff]
        %v769 = vld [vmem:[#allocation13 + $0xc0] sm:$0xff]
        %v770 = vld [vmem:[#allocation13 + $0xc8] sm:$0xff]
        %v771 = vld [vmem:[#allocation13 + $0xd0] sm:$0xff]
        %v772 = vld [vmem:[#allocation13 + $0xd8] sm:$0xff]
        %v773 = vld [vmem:[#allocation13 + $0xe0] sm:$0xff]
        %v774 = vld [vmem:[#allocation13 + $0xe8] sm:$0xff]
        %v775 = vld [vmem:[#allocation13 + $0xf0] sm:$0xff]
        %v776 = vld [vmem:[#allocation13 + $0xf8] sm:$0xff]
        %v777 = vld [vmem:[#allocation13 + $0x100] sm:$0xff]
        %v778 = vld [vmem:[#allocation13 + $0x108] sm:$0xff]
        %v779 = vld [vmem:[#allocation13 + $0x110] sm:$0xff]
        %v780 = vld [vmem:[#allocation13 + $0x118] sm:$0xff]
        %v781 = vld [vmem:[#allocation13 + $0x120] sm:$0xff]
        %v782 = vld [vmem:[#allocation13 + $0x128] sm:$0xff]
        %v783 = vld [vmem:[#allocation13 + $0x130] sm:$0xff]
        %v784 = vld [vmem:[#allocation13 + $0x138] sm:$0xff]
        %v785 = vld [vmem:[#allocation13 + $0x140] sm:$0xff]
        %v786 = vld [vmem:[#allocation13 + $0x148] sm:$0xff]
        %v787 = vld [vmem:[#allocation13 + $0x150] sm:$0xff]
        %v788 = vld [vmem:[#allocation13 + $0x158] sm:$0xff]
        %v789 = vld [vmem:[#allocation13 + $0x160] sm:$0xff]
        %v790 = vld [vmem:[#allocation13 + $0x168] sm:$0xff]
        %v791 = vld [vmem:[#allocation13 + $0x170] sm:$0xff]
        %v792 = vld [vmem:[#allocation13 + $0x178] sm:$0xff]
        %v793 = vld [vmem:[#allocation13 + $0x180] sm:$0xff]
        %v794 = vld [vmem:[#allocation13 + $0x188] sm:$0xff]
        %v795 = vld [vmem:[#allocation13 + $0x190] sm:$0xff]
        %v796 = vld [vmem:[#allocation13 + $0x198] sm:$0xff]
        %v797 = vld [vmem:[#allocation13 + $0x1a0] sm:$0xff]
        %v798 = vld [vmem:[#allocation13 + $0x1a8] sm:$0xff]
        %v799 = vld [vmem:[#allocation13 + $0x1b0] sm:$0xff]
        %v800 = vld [vmem:[#allocation13 + $0x1b8] sm:$0xff]
        %v801 = vld [vmem:[#allocation13 + $0x1c0] sm:$0xff]
        %v802 = vld [vmem:[#allocation13 + $0x1c8] sm:$0xff]
        %v803 = vld [vmem:[#allocation13 + $0x1d0] sm:$0xff]
        %v804 = vld [vmem:[#allocation13 + $0x1d8] sm:$0xff]
        %v805 = vld [vmem:[#allocation13 + $0x1e0] sm:$0xff]
        %v806 = vld [vmem:[#allocation13 + $0x1e8] sm:$0xff]
        %v807 = vld [vmem:[#allocation13 + $0x1f0] sm:$0xff]
        %v808 = vld [vmem:[#allocation13 + $0x1f8] sm:$0xff]
        %v809 = vld [vmem:[%s7] sm:$0xf]
        %v811 = vperm.slane %v809, 0
        %v812 = vperm.slane %v809, 1
        %v813 = vperm.slane %v809, 2
        %v814 = vperm.slane %v809, 3
        %821 = vst [vmem:[#allocation1] ss:$9 sm:$0xff] %v743
        %s822 = scalar_lea.vmem [#allocation1], 1
        %823 = vst [vmem:[%s822] ss:$9 sm:$0xff] %v744
        %v824 = vld [vmem:[#allocation1] sm:$0xff]
        %826 = vmatpush.msra.mxu0 %v805
        %827 = vmatpush.msra.mxu0 %v801
        %828 = vmatpush.msra.mxu0 %v797
        %829 = vmatpush.msra.mxu0 %v793
        %830 = vmatpush.msra.mxu0 %v789
        %831 = vmatpush.msra.mxu0 %v785
        %832 = vmatpush.msra.mxu0 %v781
        %833 = vmatpush.msra.mxu0 %v777
        %834 = vmatpush.msra.mxu0 %v773
        %835 = vmatpush.msra.mxu0 %v769
        %836 = vmatpush.msra.mxu0 %v765
        %837 = vmatpush.msra.mxu0 %v761
        %838 = vmatpush.msra.mxu0 %v757
        %839 = vmatpush.msra.mxu0 %v753
        %840 = vmatpush.msra.mxu0 %v749
        %841 = vmatpush.msra.mxu0 %v745
        %842 = vmatmul.f32.gmra.mxu0 %v824
        %v843 = vpop.f32.mrf.mxu0
        %v844 = vadd.f32 %v811, %v843
        %845 = vdwg.mxu0
        %846 = vmatpush.msra.mxu0 %v806
        %847 = vmatpush.msra.mxu0 %v802
        %848 = vmatpush.msra.mxu0 %v798
        %849 = vmatpush.msra.mxu0 %v794
        %850 = vmatpush.msra.mxu0 %v790
        %851 = vmatpush.msra.mxu0 %v786
        %852 = vmatpush.msra.mxu0 %v782
        %853 = vmatpush.msra.mxu0 %v778
        %854 = vmatpush.msra.mxu0 %v774
        %855 = vmatpush.msra.mxu0 %v770
        %856 = vmatpush.msra.mxu0 %v766
        %857 = vmatpush.msra.mxu0 %v762
        %858 = vmatpush.msra.mxu0 %v758
        %859 = vmatpush.msra.mxu0 %v754
        %860 = vmatpush.msra.mxu0 %v750
        %861 = vmatpush.msra.mxu0 %v746
        %862 = vmatmul.f32.gmra.mxu0 %v824
        %v863 = vpop.f32.mrf.mxu0
        %v864 = vadd.f32 %v812, %v863
        %865 = vdwg.mxu0
        %866 = vmatpush.msra.mxu0 %v807
        %867 = vmatpush.msra.mxu0 %v803
        %868 = vmatpush.msra.mxu0 %v799
        %869 = vmatpush.msra.mxu0 %v795
        %870 = vmatpush.msra.mxu0 %v791
        %871 = vmatpush.msra.mxu0 %v787
        %872 = vmatpush.msra.mxu0 %v783
        %873 = vmatpush.msra.mxu0 %v779
        %874 = vmatpush.msra.mxu0 %v775
        %875 = vmatpush.msra.mxu0 %v771
        %876 = vmatpush.msra.mxu0 %v767
        %877 = vmatpush.msra.mxu0 %v763
        %878 = vmatpush.msra.mxu0 %v759
        %879 = vmatpush.msra.mxu0 %v755
        %880 = vmatpush.msra.mxu0 %v751
        %881 = vmatpush.msra.mxu0 %v747
        %882 = vmatmul.f32.gmra.mxu0 %v824
        %v883 = vpop.f32.mrf.mxu0
        %v884 = vadd.f32 %v813, %v883
        %885 = vdwg.mxu0
        %886 = vmatpush.msra.mxu0 %v808
        %887 = vmatpush.msra.mxu0 %v804
        %888 = vmatpush.msra.mxu0 %v800
        %889 = vmatpush.msra.mxu0 %v796
        %890 = vmatpush.msra.mxu0 %v792
        %891 = vmatpush.msra.mxu0 %v788
        %892 = vmatpush.msra.mxu0 %v784
        %893 = vmatpush.msra.mxu0 %v780
        %894 = vmatpush.msra.mxu0 %v776
        %895 = vmatpush.msra.mxu0 %v772
        %896 = vmatpush.msra.mxu0 %v768
        %897 = vmatpush.msra.mxu0 %v764
        %898 = vmatpush.msra.mxu0 %v760
        %899 = vmatpush.msra.mxu0 %v756
        %900 = vmatpush.msra.mxu0 %v752
        %901 = vmatpush.msra.mxu0 %v748
        %902 = vmatmul.f32.gmra.mxu0 %v824
        %v903 = vpop.f32.mrf.mxu0
        %v904 = vadd.f32 %v814, %v903
        %905 = vdwg.mxu0
        %v906 = vmax.f32 %v844, -0.9
        %v907 = vmin.f32 %v906, 10.0
        %v909 = vrot.slane %v907, 1
        %v912 = vrot.slane %v864, 1
        %v913 = vmax.f32 %v884, -0.9
        %v914 = vmin.f32 %v913, 10.0
        %v916 = vrot.slane %v914, 1
        %v919 = vrot.slane %v904, 1
        %v920 = vld [vmem:[#allocation7] sm:$0x1]
        %v921 = vld [vmem:[#allocation8] sm:$0x1]
        %922 = vadd.xlane.f32.xlu0 %v741
        %v923 = vpop.xlane.xlu0 %922
        %924 = vadd.xlane.f32.xlu0 %v742
        %v925 = vpop.xlane.xlu0 %924
        %v926 = vrcp.pop 128.0
        %v927 = vmul.f32 128.0, %v926
        %v928 = vsub.f32 1.0, %v927
        %v929 = vmul.f32 %v926, %v928
        %v930 = vadd.f32 %v926, %v929
        %vm931 = vweird.f32 %v926
        %v932 = vsel %vm931, %v926, %v930
        %v933 = vmul.f32 %v923, %v932
        %v934 = vmul.f32 %v925, %v932
        %v935 = vsub.f32 %v741, %v933
        %v936 = vsub.f32 %v742, %v934
        %v937 = vmul.f32 %v935, %v935
        %v938 = vmul.f32 %v936, %v936
        %939 = vadd.xlane.f32.xlu0 %v937
        %v940 = vpop.xlane.xlu0 %939
        %941 = vadd.xlane.f32.xlu0 %v938
        %v942 = vpop.xlane.xlu0 %941
        %v943 = vmul.f32 %v940, %v932
        %v944 = vmul.f32 %v942, %v932
        %v945 = vadd.f32 %v943, 1e-05
        %v946 = vadd.f32 %v944, 1e-05
        %v947 = vrsqrt.pop %v945
        %v948 = vmul.f32 %v947, %v945
        %v949 = vmul.f32 %v948, %v947
        %v950 = vmul.f32 0.5, %v949
        %v951 = vsub.f32 1.5, %v950
        %v952 = vmul.f32 %v947, %v951
        %vm953 = vweird.f32 %v945
        %vm954 = vweird.f32 %v947
        %vm955 = vmor %vm953, %vm954
        %v956 = vsel %vm955, %v947, %v952
        %v957 = vrsqrt.pop %v946
        %v958 = vmul.f32 %v957, %v946
        %v959 = vmul.f32 %v958, %v957
        %v960 = vmul.f32 0.5, %v959
        %v961 = vsub.f32 1.5, %v960
        %v962 = vmul.f32 %v957, %v961
        %vm963 = vweird.f32 %v946
        %vm964 = vweird.f32 %v957
        %vm965 = vmor %vm963, %vm964
        %v966 = vsel %vm965, %v957, %v962
        %v967 = vmul.f32 %v935, %v956
        %v968 = vmul.f32 %v936, %v966
        %v970 = vperm.slane %v920, 0
        %v972 = vmul.f32 %v967, %v970
        %v973 = vmul.f32 %v968, %v970
        %v975 = vperm.slane %v921, 0
        %v977 = vadd.f32 %v972, %v975
        %v978 = vadd.f32 %v973, %v975
        %v979 = vadd.f32 %v907, 1.0
        %v980 = vadd.f32 %v909, 1.0
        %v983 = vperm.slane %v979, 0
        %v984 = vperm.slane %v980, 0
        %v987 = vmul.f32 %v977, %v983
        %v988 = vmul.f32 %v978, %v984
        %v989 = vperm.slane %v864, 0
        %v990 = vperm.slane %v912, 0
        %v993 = vadd.f32 %v987, %v989
        %v994 = vadd.f32 %v988, %v990
        %v995 = vpack.c.bf16 %v994, %v993
        %v996 = vld [vmem:[#allocation14] sm:$0xff]
        %v997 = vld [vmem:[#allocation14 + $0x8] sm:$0xf]
        %v998 = vld [vmem:[#allocation14 + $0xc] sm:$0xff]
        %v999 = vld [vmem:[#allocation14 + $0x14] sm:$0xf]
        %v1000 = vld [vmem:[#allocation14 + $0x18] sm:$0xff]
        %v1001 = vld [vmem:[#allocation14 + $0x20] sm:$0xf]
        %v1002 = vld [vmem:[#allocation14 + $0x24] sm:$0xff]
        %v1003 = vld [vmem:[#allocation14 + $0x2c] sm:$0xf]
        %v1004 = vld [vmem:[#allocation14 + $0x30] sm:$0xff]
        %v1005 = vld [vmem:[#allocation14 + $0x38] sm:$0xf]
        %v1006 = vld [vmem:[#allocation14 + $0x3c] sm:$0xff]
        %v1007 = vld [vmem:[#allocation14 + $0x44] sm:$0xf]
        %v1008 = vld [vmem:[#allocation14 + $0x48] sm:$0xff]
        %v1009 = vld [vmem:[#allocation14 + $0x50] sm:$0xf]
        %v1010 = vld [vmem:[#allocation14 + $0x54] sm:$0xff]
        %v1011 = vld [vmem:[#allocation14 + $0x5c] sm:$0xf]
        %v1012 = vld [vmem:[#allocation14 + $0x60] sm:$0xff]
        %v1013 = vld [vmem:[#allocation14 + $0x68] sm:$0xf]
        %v1014 = vld [vmem:[#allocation14 + $0x6c] sm:$0xff]
        %v1015 = vld [vmem:[#allocation14 + $0x74] sm:$0xf]
        %v1016 = vld [vmem:[#allocation14 + $0x78] sm:$0xff]
        %v1017 = vld [vmem:[#allocation14 + $0x80] sm:$0xf]
        %v1018 = vld [vmem:[#allocation14 + $0x84] sm:$0xff]
        %v1019 = vld [vmem:[#allocation14 + $0x8c] sm:$0xf]
        %v1020 = vld [vmem:[#allocation14 + $0x90] sm:$0xff]
        %v1021 = vld [vmem:[#allocation14 + $0x98] sm:$0xf]
        %v1022 = vld [vmem:[#allocation14 + $0x9c] sm:$0xff]
        %v1023 = vld [vmem:[#allocation14 + $0xa4] sm:$0xf]
        %v1024 = vld [vmem:[#allocation14 + $0xa8] sm:$0xff]
        %v1025 = vld [vmem:[#allocation14 + $0xb0] sm:$0xf]
        %v1026 = vld [vmem:[#allocation14 + $0xb4] sm:$0xff]
        %v1027 = vld [vmem:[#allocation14 + $0xbc] sm:$0xf]
        %v1028 = vld [vmem:[#allocation16] sm:$0x7]
        %v1030 = vperm.slane %v1028, 0
        %v1031 = vperm.slane %v1028, 1
        %v1032 = vperm.slane %v1028, 2
        %v1068 = vunpack.c.l.b16 %v996
        %v1069 = vunpack.c.h.b16 %v996
        %v1070 = vunpack.c.l.b16 %v997
        %v1071 = vunpack.c.l.b16 %v998
        %v1072 = vunpack.c.h.b16 %v998
        %v1073 = vunpack.c.l.b16 %v999
        %v1074 = vunpack.c.l.b16 %v1000
        %v1075 = vunpack.c.h.b16 %v1000
        %v1076 = vunpack.c.l.b16 %v1001
        %v1077 = vunpack.c.l.b16 %v1002
        %v1078 = vunpack.c.h.b16 %v1002
        %v1079 = vunpack.c.l.b16 %v1003
        %v1080 = vunpack.c.l.b16 %v1004
        %v1081 = vunpack.c.h.b16 %v1004
        %v1082 = vunpack.c.l.b16 %v1005
        %v1083 = vunpack.c.l.b16 %v1006
        %v1084 = vunpack.c.h.b16 %v1006
        %v1085 = vunpack.c.l.b16 %v1007
        %v1086 = vunpack.c.l.b16 %v1008
        %v1087 = vunpack.c.h.b16 %v1008
        %v1088 = vunpack.c.l.b16 %v1009
        %v1089 = vunpack.c.l.b16 %v1010
        %v1090 = vunpack.c.h.b16 %v1010
        %v1091 = vunpack.c.l.b16 %v1011
        %v1092 = vunpack.c.l.b16 %v1012
        %v1093 = vunpack.c.h.b16 %v1012
        %v1094 = vunpack.c.l.b16 %v1013
        %v1095 = vunpack.c.l.b16 %v1014
        %v1096 = vunpack.c.h.b16 %v1014
        %v1097 = vunpack.c.l.b16 %v1015
        %v1098 = vunpack.c.l.b16 %v1016
        %v1099 = vunpack.c.h.b16 %v1016
        %v1100 = vunpack.c.l.b16 %v1017
        %v1101 = vunpack.c.l.b16 %v1018
        %v1102 = vunpack.c.h.b16 %v1018
        %v1103 = vunpack.c.l.b16 %v1019
        %v1104 = vunpack.c.l.b16 %v1020
        %v1105 = vunpack.c.h.b16 %v1020
        %v1106 = vunpack.c.l.b16 %v1021
        %v1107 = vunpack.c.l.b16 %v1022
        %v1108 = vunpack.c.h.b16 %v1022
        %v1109 = vunpack.c.l.b16 %v1023
        %v1110 = vunpack.c.l.b16 %v1024
        %v1111 = vunpack.c.h.b16 %v1024
        %v1112 = vunpack.c.l.b16 %v1025
        %v1113 = vunpack.c.l.b16 %v1026
        %v1114 = vunpack.c.h.b16 %v1026
        %v1115 = vunpack.c.l.b16 %v1027
        %v1116 = vpack.c.b16 %v1071, %v1068
        %v1117 = vpack.c.b16 %v1072, %v1069
        %v1118 = vpack.c.b16 %v1073, %v1070
        %v1119 = vpack.c.b16 %v1077, %v1074
        %v1120 = vpack.c.b16 %v1078, %v1075
        %v1121 = vpack.c.b16 %v1079, %v1076
        %v1122 = vpack.c.b16 %v1083, %v1080
        %v1123 = vpack.c.b16 %v1084, %v1081
        %v1124 = vpack.c.b16 %v1085, %v1082
        %v1125 = vpack.c.b16 %v1089, %v1086
        %v1126 = vpack.c.b16 %v1090, %v1087
        %v1127 = vpack.c.b16 %v1091, %v1088
        %v1128 = vpack.c.b16 %v1095, %v1092
        %v1129 = vpack.c.b16 %v1096, %v1093
        %v1130 = vpack.c.b16 %v1097, %v1094
        %v1131 = vpack.c.b16 %v1101, %v1098
        %v1132 = vpack.c.b16 %v1102, %v1099
        %v1133 = vpack.c.b16 %v1103, %v1100
        %v1134 = vpack.c.b16 %v1107, %v1104
        %v1135 = vpack.c.b16 %v1108, %v1105
        %v1136 = vpack.c.b16 %v1109, %v1106
        %v1137 = vpack.c.b16 %v1113, %v1110
        %v1138 = vpack.c.b16 %v1114, %v1111
        %v1139 = vpack.c.b16 %v1115, %v1112
        %1164 = vmatpush.bf16.msra.mxu0 %v1137
        %1165 = vmatpush.bf16.msra.mxu0 %v1134
        %1166 = vmatpush.bf16.msra.mxu0 %v1131
        %1167 = vmatpush.bf16.msra.mxu0 %v1128
        %1168 = vmatpush.bf16.msra.mxu0 %v1125
        %1169 = vmatpush.bf16.msra.mxu0 %v1122
        %1170 = vmatpush.bf16.msra.mxu0 %v1119
        %1171 = vmatpush.bf16.msra.mxu0 %v1116
        %1172 = vmatmul.bf16.gmra.mxu0 %v995
        %v1173 = vpop.f32.mrf.mxu0
        %v1174 = vadd.f32 %v1030, %v1173
        %v1175 = vpop.f32.mrf.mxu0
        %v1176 = vadd.f32 %v1030, %v1175
        %1177 = vdwg.mxu0
        %1178 = vmatpush.bf16.msra.mxu0 %v1138
        %1179 = vmatpush.bf16.msra.mxu0 %v1135
        %1180 = vmatpush.bf16.msra.mxu0 %v1132
        %1181 = vmatpush.bf16.msra.mxu0 %v1129
        %1182 = vmatpush.bf16.msra.mxu0 %v1126
        %1183 = vmatpush.bf16.msra.mxu0 %v1123
        %1184 = vmatpush.bf16.msra.mxu0 %v1120
        %1185 = vmatpush.bf16.msra.mxu0 %v1117
        %1186 = vmatmul.bf16.gmra.mxu0 %v995
        %v1187 = vpop.f32.mrf.mxu0
        %v1188 = vadd.f32 %v1031, %v1187
        %v1189 = vpop.f32.mrf.mxu0
        %v1190 = vadd.f32 %v1031, %v1189
        %1191 = vdwg.mxu0
        %1192 = vmatpush.bf16.msra.mxu0 %v1139
        %1193 = vmatpush.bf16.msra.mxu0 %v1136
        %1194 = vmatpush.bf16.msra.mxu0 %v1133
        %1195 = vmatpush.bf16.msra.mxu0 %v1130
        %1196 = vmatpush.bf16.msra.mxu0 %v1127
        %1197 = vmatpush.bf16.msra.mxu0 %v1124
        %1198 = vmatpush.bf16.msra.mxu0 %v1121
        %1199 = vmatpush.bf16.msra.mxu0 %v1118
        %1200 = vmatmul.bf16.gmra.mxu0 %v995
        %v1201 = vpop.f32.mrf.mxu0
        %v1202 = vadd.f32 %v1032, %v1201
        %v1203 = vpop.f32.mrf.mxu0
        %v1204 = vadd.f32 %v1032, %v1203
        %1205 = vdwg.mxu0
        %v1206 = vmul.f32 %v1174, 0.17677669
        %v1207 = vmul.f32 %v1176, 0.17677669
        %vm1208 = vcmask 261120
        %v1210 = vsel %vm1208, %v1206, 0
        %v1213 = vsel %vm1208, %v1188, 0
        %1215 = vmatpush.xpose.msra.mxu0 0.0
        %1216 = vmatpush.xpose.msra.mxu0 0.0
        %1217 = vmatpush.xpose.msra.mxu0 0.0
        %1218 = vmatpush.xpose.msra.mxu0 0.0
        %1219 = vmatpush.xpose.msra.mxu0 0.0
        %1220 = vmatpush.xpose.msra.mxu0 0.0
        %1221 = vmatpush.xpose.msra.mxu0 0.0
        %1222 = vmatpush.xpose.msra.mxu0 0.0
        %1223 = vmatpush.xpose.msra.mxu0 0.0
        %1224 = vmatpush.xpose.msra.mxu0 0.0
        %1225 = vmatpush.xpose.msra.mxu0 0.0
        %1226 = vmatpush.xpose.msra.mxu0 0.0
        %1227 = vmatpush.xpose.msra.mxu0 0.0
        %1228 = vmatpush.xpose.msra.mxu0 0.0
        %1229 = vmatpush.xpose.msra.mxu0 0.0
        %1230 = vmatpush.xpose.msra.mxu0 %v1213
        %1231 = vmatmul.f32.gmra.mxu0 %v1210
        %v1232 = vpop.f32.mrf.mxu0
        %v1233 = vadd.f32 0.0, %v1232
        %1234 = vdwg.mxu0
        %v1236 = vsel %vm1208, %v1207, 0
        %v1239 = vsel %vm1208, %v1190, 0
        %1241 = vmatpush.xpose.msra.mxu0 0.0
        %1242 = vmatpush.xpose.msra.mxu0 0.0
        %1243 = vmatpush.xpose.msra.mxu0 0.0
        %1244 = vmatpush.xpose.msra.mxu0 0.0
        %1245 = vmatpush.xpose.msra.mxu0 0.0
        %1246 = vmatpush.xpose.msra.mxu0 0.0
        %1247 = vmatpush.xpose.msra.mxu0 0.0
        %1248 = vmatpush.xpose.msra.mxu0 0.0
        %1249 = vmatpush.xpose.msra.mxu0 0.0
        %1250 = vmatpush.xpose.msra.mxu0 0.0
        %1251 = vmatpush.xpose.msra.mxu0 0.0
        %1252 = vmatpush.xpose.msra.mxu0 0.0
        %1253 = vmatpush.xpose.msra.mxu0 0.0
        %1254 = vmatpush.xpose.msra.mxu0 0.0
        %1255 = vmatpush.xpose.msra.mxu0 0.0
        %1256 = vmatpush.xpose.msra.mxu0 %v1239
        %1257 = vmatmul.f32.gmra.mxu0 %v1236
        %v1258 = vpop.f32.mrf.mxu0
        %v1259 = vadd.f32 0.0, %v1258
        %1260 = vdwg.mxu0
        %vm1261 = vcmask 64512
        %v1262 = vsel %vm1261, %v1233, -inf
        %1263 = vmax.xlane.f32.xlu0 %v1262
        %v1264 = vpop.xlane.xlu0 %1263
        %v1265 = vsel %vm1261, %v1259, -inf
        %1266 = vmax.xlane.f32.xlu0 %v1265
        %v1267 = vpop.xlane.xlu0 %1266
        %v1268 = vsub.f32 %v1233, %v1264
        %v1269 = vsub.f32 %v1259, %v1267
        %v1270 = vmul.f32 %v1268, 1.442695
        %v1271 = vpow.pop %v1270
        %v1272 = vmul.f32 %v1269, 1.442695
        %v1273 = vpow.pop %v1272
        %v1274 = vsel %vm1261, %v1271, 0.0
        %1275 = vadd.xlane.f32.xlu0 %v1274
        %v1276 = vpop.xlane.xlu0 %1275
        %v1277 = vsel %vm1261, %v1273, 0.0
        %1278 = vadd.xlane.f32.xlu0 %v1277
        %v1279 = vpop.xlane.xlu0 %1278
        %v1280 = vrcp.pop %v1276
        %v1281 = vrcp.pop %v1279
        %v1282 = vmul.f32 %v1271, %v1280
        %v1283 = vmul.f32 %v1273, %v1281
        %v1285 = vsel %vm1261, %v1282, 0
        %1287 = vmatpush.msra.mxu0 0.0
        %1288 = vmatpush.msra.mxu0 0.0
        %1289 = vmatpush.msra.mxu0 0.0
        %1290 = vmatpush.msra.mxu0 0.0
        %1291 = vmatpush.msra.mxu0 0.0
        %1292 = vmatpush.msra.mxu0 0.0
        %1293 = vmatpush.msra.mxu0 0.0
        %1294 = vmatpush.msra.mxu0 0.0
        %1295 = vmatpush.msra.mxu0 0.0
        %1296 = vmatpush.msra.mxu0 0.0
        %1297 = vmatpush.msra.mxu0 0.0
        %1298 = vmatpush.msra.mxu0 0.0
        %1299 = vmatpush.msra.mxu0 0.0
        %1300 = vmatpush.msra.mxu0 0.0
        %1301 = vmatpush.msra.mxu0 0.0
        %1302 = vmatpush.msra.mxu0 %v1202
        %1303 = vmatmul.f32.gmra.mxu0 %v1285
        %v1304 = vpop.f32.mrf.mxu0
        %v1305 = vadd.f32 0.0, %v1304
        %1306 = vdwg.mxu0
        %v1308 = vsel %vm1261, %v1283, 0
        %1310 = vmatpush.msra.mxu0 0.0
        %1311 = vmatpush.msra.mxu0 0.0
        %1312 = vmatpush.msra.mxu0 0.0
        %1313 = vmatpush.msra.mxu0 0.0
        %1314 = vmatpush.msra.mxu0 0.0
        %1315 = vmatpush.msra.mxu0 0.0
        %1316 = vmatpush.msra.mxu0 0.0
        %1317 = vmatpush.msra.mxu0 0.0
        %1318 = vmatpush.msra.mxu0 0.0
        %1319 = vmatpush.msra.mxu0 0.0
        %1320 = vmatpush.msra.mxu0 0.0
        %1321 = vmatpush.msra.mxu0 0.0
        %1322 = vmatpush.msra.mxu0 0.0
        %1323 = vmatpush.msra.mxu0 0.0
        %1324 = vmatpush.msra.mxu0 0.0
        %1325 = vmatpush.msra.mxu0 %v1204
        %1326 = vmatmul.f32.gmra.mxu0 %v1308
        %v1327 = vpop.f32.mrf.mxu0
        %v1328 = vadd.f32 0.0, %v1327
        %1329 = vdwg.mxu0
        %1330 = vrot.lane.b32.xlu0 %v1206, 96
        %v1331 = vpop.permute.xlu0 %1330
        %1332 = vrot.lane.b32.xlu0 %v1188, 96
        %v1333 = vpop.permute.xlu0 %1332
        %v1334 = vsel %vm1208, %v1331, 0
        %v1336 = vsel %vm1208, %v1333, 0
        %1338 = vmatpush.xpose.msra.mxu0 0.0
        %1339 = vmatpush.xpose.msra.mxu0 0.0
        %1340 = vmatpush.xpose.msra.mxu0 0.0
        %1341 = vmatpush.xpose.msra.mxu0 0.0
        %1342 = vmatpush.xpose.msra.mxu0 0.0
        %1343 = vmatpush.xpose.msra.mxu0 0.0
        %1344 = vmatpush.xpose.msra.mxu0 0.0
        %1345 = vmatpush.xpose.msra.mxu0 0.0
        %1346 = vmatpush.xpose.msra.mxu0 0.0
        %1347 = vmatpush.xpose.msra.mxu0 0.0
        %1348 = vmatpush.xpose.msra.mxu0 0.0
        %1349 = vmatpush.xpose.msra.mxu0 0.0
        %1350 = vmatpush.xpose.msra.mxu0 0.0
        %1351 = vmatpush.xpose.msra.mxu0 0.0
        %1352 = vmatpush.xpose.msra.mxu0 0.0
        %1353 = vmatpush.xpose.msra.mxu0 %v1336
        %1354 = vmatmul.f32.gmra.mxu0 %v1334
        %v1355 = vpop.f32.mrf.mxu0
        %v1356 = vadd.f32 0.0, %v1355
        %1357 = vdwg.mxu0
        %1358 = vrot.lane.b32.xlu0 %v1207, 96
        %v1359 = vpop.permute.xlu0 %1358
        %1360 = vrot.lane.b32.xlu0 %v1190, 96
        %v1361 = vpop.permute.xlu0 %1360
        %v1362 = vsel %vm1208, %v1359, 0
        %v1364 = vsel %vm1208, %v1361, 0
        %1366 = vmatpush.xpose.msra.mxu0 0.0
        %1367 = vmatpush.xpose.msra.mxu0 0.0
        %1368 = vmatpush.xpose.msra.mxu0 0.0
        %1369 = vmatpush.xpose.msra.mxu0 0.0
        %1370 = vmatpush.xpose.msra.mxu0 0.0
        %1371 = vmatpush.xpose.msra.mxu0 0.0
        %1372 = vmatpush.xpose.msra.mxu0 0.0
        %1373 = vmatpush.xpose.msra.mxu0 0.0
        %1374 = vmatpush.xpose.msra.mxu0 0.0
        %1375 = vmatpush.xpose.msra.mxu0 0.0
        %1376 = vmatpush.xpose.msra.mxu0 0.0
        %1377 = vmatpush.xpose.msra.mxu0 0.0
        %1378 = vmatpush.xpose.msra.mxu0 0.0
        %1379 = vmatpush.xpose.msra.mxu0 0.0
        %1380 = vmatpush.xpose.msra.mxu0 0.0
        %1381 = vmatpush.xpose.msra.mxu0 %v1364
        %1382 = vmatmul.f32.gmra.mxu0 %v1362
        %v1383 = vpop.f32.mrf.mxu0
        %v1384 = vadd.f32 0.0, %v1383
        %1385 = vdwg.mxu0
        %v1386 = vsel %vm1261, %v1356, -inf
        %1387 = vmax.xlane.f32.xlu0 %v1386
        %v1388 = vpop.xlane.xlu0 %1387
        %v1389 = vsel %vm1261, %v1384, -inf
        %1390 = vmax.xlane.f32.xlu0 %v1389
        %v1391 = vpop.xlane.xlu0 %1390
        %v1392 = vsub.f32 %v1356, %v1388
        %v1393 = vsub.f32 %v1384, %v1391
        %v1394 = vmul.f32 %v1392, 1.442695
        %v1395 = vpow.pop %v1394
        %v1396 = vmul.f32 %v1393, 1.442695
        %v1397 = vpow.pop %v1396
        %v1398 = vsel %vm1261, %v1395, 0.0
        %1399 = vadd.xlane.f32.xlu0 %v1398
        %v1400 = vpop.xlane.xlu0 %1399
        %v1401 = vsel %vm1261, %v1397, 0.0
        %1402 = vadd.xlane.f32.xlu0 %v1401
        %v1403 = vpop.xlane.xlu0 %1402
        %v1404 = vrcp.pop %v1400
        %v1405 = vrcp.pop %v1403
        %v1406 = vmul.f32 %v1395, %v1404
        %v1407 = vmul.f32 %v1397, %v1405
        %1409 = vrot.lane.b32.xlu0 %v1202, 96
        %v1410 = vpop.permute.xlu0 %1409
        %v1413 = vsel %vm1261, %v1406, 0
        %1415 = vmatpush.msra.mxu0 0.0
        %1416 = vmatpush.msra.mxu0 0.0
        %1417 = vmatpush.msra.mxu0 0.0
        %1418 = vmatpush.msra.mxu0 0.0
        %1419 = vmatpush.msra.mxu0 0.0
        %1420 = vmatpush.msra.mxu0 0.0
        %1421 = vmatpush.msra.mxu0 0.0
        %1422 = vmatpush.msra.mxu0 0.0
        %1423 = vmatpush.msra.mxu0 0.0
        %1424 = vmatpush.msra.mxu0 0.0
        %1425 = vmatpush.msra.mxu0 0.0
        %1426 = vmatpush.msra.mxu0 0.0
        %1427 = vmatpush.msra.mxu0 0.0
        %1428 = vmatpush.msra.mxu0 0.0
        %1429 = vmatpush.msra.mxu0 0.0
        %1430 = vmatpush.msra.mxu0 %v1410
        %1431 = vmatmul.f32.gmra.mxu0 %v1413
        %v1432 = vpop.f32.mrf.mxu0
        %v1433 = vadd.f32 0.0, %v1432
        %1434 = vdwg.mxu0
        %1436 = vrot.lane.b32.xlu0 %v1204, 96
        %v1437 = vpop.permute.xlu0 %1436
        %v1440 = vsel %vm1261, %v1407, 0
        %1442 = vmatpush.msra.mxu0 0.0
        %1443 = vmatpush.msra.mxu0 0.0
        %1444 = vmatpush.msra.mxu0 0.0
        %1445 = vmatpush.msra.mxu0 0.0
        %1446 = vmatpush.msra.mxu0 0.0
        %1447 = vmatpush.msra.mxu0 0.0
        %1448 = vmatpush.msra.mxu0 0.0
        %1449 = vmatpush.msra.mxu0 0.0
        %1450 = vmatpush.msra.mxu0 0.0
        %1451 = vmatpush.msra.mxu0 0.0
        %1452 = vmatpush.msra.mxu0 0.0
        %1453 = vmatpush.msra.mxu0 0.0
        %1454 = vmatpush.msra.mxu0 0.0
        %1455 = vmatpush.msra.mxu0 0.0
        %1456 = vmatpush.msra.mxu0 0.0
        %1457 = vmatpush.msra.mxu0 %v1437
        %1458 = vmatmul.f32.gmra.mxu0 %v1440
        %v1459 = vpop.f32.mrf.mxu0
        %v1460 = vadd.f32 0.0, %v1459
        %1461 = vdwg.mxu0
        %1462 = vrot.lane.b32.xlu0 %v1206, 64
        %v1463 = vpop.permute.xlu0 %1462
        %1464 = vrot.lane.b32.xlu0 %v1188, 64
        %v1465 = vpop.permute.xlu0 %1464
        %v1466 = vsel %vm1208, %v1463, 0
        %v1468 = vsel %vm1208, %v1465, 0
        %1470 = vmatpush.xpose.msra.mxu0 0.0
        %1471 = vmatpush.xpose.msra.mxu0 0.0
        %1472 = vmatpush.xpose.msra.mxu0 0.0
        %1473 = vmatpush.xpose.msra.mxu0 0.0
        %1474 = vmatpush.xpose.msra.mxu0 0.0
        %1475 = vmatpush.xpose.msra.mxu0 0.0
        %1476 = vmatpush.xpose.msra.mxu0 0.0
        %1477 = vmatpush.xpose.msra.mxu0 0.0
        %1478 = vmatpush.xpose.msra.mxu0 0.0
        %1479 = vmatpush.xpose.msra.mxu0 0.0
        %1480 = vmatpush.xpose.msra.mxu0 0.0
        %1481 = vmatpush.xpose.msra.mxu0 0.0
        %1482 = vmatpush.xpose.msra.mxu0 0.0
        %1483 = vmatpush.xpose.msra.mxu0 0.0
        %1484 = vmatpush.xpose.msra.mxu0 0.0
        %1485 = vmatpush.xpose.msra.mxu0 %v1468
        %1486 = vmatmul.f32.gmra.mxu0 %v1466
        %v1487 = vpop.f32.mrf.mxu0
        %v1488 = vadd.f32 0.0, %v1487
        %1489 = vdwg.mxu0
        %1490 = vrot.lane.b32.xlu0 %v1207, 64
        %v1491 = vpop.permute.xlu0 %1490
        %1492 = vrot.lane.b32.xlu0 %v1190, 64
        %v1493 = vpop.permute.xlu0 %1492
        %v1494 = vsel %vm1208, %v1491, 0
        %v1496 = vsel %vm1208, %v1493, 0
        %1498 = vmatpush.xpose.msra.mxu0 0.0
        %1499 = vmatpush.xpose.msra.mxu0 0.0
        %1500 = vmatpush.xpose.msra.mxu0 0.0
        %1501 = vmatpush.xpose.msra.mxu0 0.0
        %1502 = vmatpush.xpose.msra.mxu0 0.0
        %1503 = vmatpush.xpose.msra.mxu0 0.0
        %1504 = vmatpush.xpose.msra.mxu0 0.0
        %1505 = vmatpush.xpose.msra.mxu0 0.0
        %1506 = vmatpush.xpose.msra.mxu0 0.0
        %1507 = vmatpush.xpose.msra.mxu0 0.0
        %1508 = vmatpush.xpose.msra.mxu0 0.0
        %1509 = vmatpush.xpose.msra.mxu0 0.0
        %1510 = vmatpush.xpose.msra.mxu0 0.0
        %1511 = vmatpush.xpose.msra.mxu0 0.0
        %1512 = vmatpush.xpose.msra.mxu0 0.0
        %1513 = vmatpush.xpose.msra.mxu0 %v1496
        %1514 = vmatmul.f32.gmra.mxu0 %v1494
        %v1515 = vpop.f32.mrf.mxu0
        %v1516 = vadd.f32 0.0, %v1515
        %1517 = vdwg.mxu0
        %v1518 = vsel %vm1261, %v1488, -inf
        %1519 = vmax.xlane.f32.xlu0 %v1518
        %v1520 = vpop.xlane.xlu0 %1519
        %v1521 = vsel %vm1261, %v1516, -inf
        %1522 = vmax.xlane.f32.xlu0 %v1521
        %v1523 = vpop.xlane.xlu0 %1522
        %v1524 = vsub.f32 %v1488, %v1520
        %v1525 = vsub.f32 %v1516, %v1523
        %v1526 = vmul.f32 %v1524, 1.442695
        %v1527 = vpow.pop %v1526
        %v1528 = vmul.f32 %v1525, 1.442695
        %v1529 = vpow.pop %v1528
        %v1530 = vsel %vm1261, %v1527, 0.0
        %1531 = vadd.xlane.f32.xlu0 %v1530
        %v1532 = vpop.xlane.xlu0 %1531
        %v1533 = vsel %vm1261, %v1529, 0.0
        %1534 = vadd.xlane.f32.xlu0 %v1533
        %v1535 = vpop.xlane.xlu0 %1534
        %v1536 = vrcp.pop %v1532
        %v1537 = vrcp.pop %v1535
        %v1538 = vmul.f32 %v1527, %v1536
        %v1539 = vmul.f32 %v1529, %v1537
        %1540 = vrot.lane.b32.xlu0 %v1202, 64
        %v1541 = vpop.permute.xlu0 %1540
        %v1544 = vsel %vm1261, %v1538, 0
        %1546 = vmatpush.msra.mxu0 0.0
        %1547 = vmatpush.msra.mxu0 0.0
        %1548 = vmatpush.msra.mxu0 0.0
        %1549 = vmatpush.msra.mxu0 0.0
        %1550 = vmatpush.msra.mxu0 0.0
        %1551 = vmatpush.msra.mxu0 0.0
        %1552 = vmatpush.msra.mxu0 0.0
        %1553 = vmatpush.msra.mxu0 0.0
        %1554 = vmatpush.msra.mxu0 0.0
        %1555 = vmatpush.msra.mxu0 0.0
        %1556 = vmatpush.msra.mxu0 0.0
        %1557 = vmatpush.msra.mxu0 0.0
        %1558 = vmatpush.msra.mxu0 0.0
        %1559 = vmatpush.msra.mxu0 0.0
        %1560 = vmatpush.msra.mxu0 0.0
        %1561 = vmatpush.msra.mxu0 %v1541
        %1562 = vmatmul.f32.gmra.mxu0 %v1544
        %v1563 = vpop.f32.mrf.mxu0
        %v1564 = vadd.f32 0.0, %v1563
        %1565 = vdwg.mxu0
        %1566 = vrot.lane.b32.xlu0 %v1204, 64
        %v1567 = vpop.permute.xlu0 %1566
        %v1570 = vsel %vm1261, %v1539, 0
        %1572 = vmatpush.msra.mxu0 0.0
        %1573 = vmatpush.msra.mxu0 0.0
        %1574 = vmatpush.msra.mxu0 0.0
        %1575 = vmatpush.msra.mxu0 0.0
        %1576 = vmatpush.msra.mxu0 0.0
        %1577 = vmatpush.msra.mxu0 0.0
        %1578 = vmatpush.msra.mxu0 0.0
        %1579 = vmatpush.msra.mxu0 0.0
        %1580 = vmatpush.msra.mxu0 0.0
        %1581 = vmatpush.msra.mxu0 0.0
        %1582 = vmatpush.msra.mxu0 0.0
        %1583 = vmatpush.msra.mxu0 0.0
        %1584 = vmatpush.msra.mxu0 0.0
        %1585 = vmatpush.msra.mxu0 0.0
        %1586 = vmatpush.msra.mxu0 0.0
        %1587 = vmatpush.msra.mxu0 %v1567
        %1588 = vmatmul.f32.gmra.mxu0 %v1570
        %v1589 = vpop.f32.mrf.mxu0
        %v1590 = vadd.f32 0.0, %v1589
        %1591 = vdwg.mxu0
        %1592 = vrot.lane.b32.xlu0 %v1206, 32
        %v1593 = vpop.permute.xlu0 %1592
        %1594 = vrot.lane.b32.xlu0 %v1188, 32
        %v1595 = vpop.permute.xlu0 %1594
        %v1596 = vsel %vm1208, %v1593, 0
        %v1598 = vsel %vm1208, %v1595, 0
        %1600 = vmatpush.xpose.msra.mxu0 0.0
        %1601 = vmatpush.xpose.msra.mxu0 0.0
        %1602 = vmatpush.xpose.msra.mxu0 0.0
        %1603 = vmatpush.xpose.msra.mxu0 0.0
        %1604 = vmatpush.xpose.msra.mxu0 0.0
        %1605 = vmatpush.xpose.msra.mxu0 0.0
        %1606 = vmatpush.xpose.msra.mxu0 0.0
        %1607 = vmatpush.xpose.msra.mxu0 0.0
        %1608 = vmatpush.xpose.msra.mxu0 0.0
        %1609 = vmatpush.xpose.msra.mxu0 0.0
        %1610 = vmatpush.xpose.msra.mxu0 0.0
        %1611 = vmatpush.xpose.msra.mxu0 0.0
        %1612 = vmatpush.xpose.msra.mxu0 0.0
        %1613 = vmatpush.xpose.msra.mxu0 0.0
        %1614 = vmatpush.xpose.msra.mxu0 0.0
        %1615 = vmatpush.xpose.msra.mxu0 %v1598
        %1616 = vmatmul.f32.gmra.mxu0 %v1596
        %v1617 = vpop.f32.mrf.mxu0
        %v1618 = vadd.f32 0.0, %v1617
        %1619 = vdwg.mxu0
        %1620 = vrot.lane.b32.xlu0 %v1207, 32
        %v1621 = vpop.permute.xlu0 %1620
        %1622 = vrot.lane.b32.xlu0 %v1190, 32
        %v1623 = vpop.permute.xlu0 %1622
        %v1624 = vsel %vm1208, %v1621, 0
        %v1626 = vsel %vm1208, %v1623, 0
        %1628 = vmatpush.xpose.msra.mxu0 0.0
        %1629 = vmatpush.xpose.msra.mxu0 0.0
        %1630 = vmatpush.xpose.msra.mxu0 0.0
        %1631 = vmatpush.xpose.msra.mxu0 0.0
        %1632 = vmatpush.xpose.msra.mxu0 0.0
        %1633 = vmatpush.xpose.msra.mxu0 0.0
        %1634 = vmatpush.xpose.msra.mxu0 0.0
        %1635 = vmatpush.xpose.msra.mxu0 0.0
        %1636 = vmatpush.xpose.msra.mxu0 0.0
        %1637 = vmatpush.xpose.msra.mxu0 0.0
        %1638 = vmatpush.xpose.msra.mxu0 0.0
        %1639 = vmatpush.xpose.msra.mxu0 0.0
        %1640 = vmatpush.xpose.msra.mxu0 0.0
        %1641 = vmatpush.xpose.msra.mxu0 0.0
        %1642 = vmatpush.xpose.msra.mxu0 0.0
        %1643 = vmatpush.xpose.msra.mxu0 %v1626
        %1644 = vmatmul.f32.gmra.mxu0 %v1624
        %v1645 = vpop.f32.mrf.mxu0
        %v1646 = vadd.f32 0.0, %v1645
        %1647 = vdwg.mxu0
        %v1648 = vsel %vm1261, %v1618, -inf
        %1649 = vmax.xlane.f32.xlu0 %v1648
        %v1650 = vpop.xlane.xlu0 %1649
        %v1651 = vsel %vm1261, %v1646, -inf
        %1652 = vmax.xlane.f32.xlu0 %v1651
        %v1653 = vpop.xlane.xlu0 %1652
        %v1654 = vsub.f32 %v1618, %v1650
        %v1655 = vsub.f32 %v1646, %v1653
        %v1656 = vmul.f32 %v1654, 1.442695
        %v1657 = vpow.pop %v1656
        %v1658 = vmul.f32 %v1655, 1.442695
        %v1659 = vpow.pop %v1658
        %v1660 = vsel %vm1261, %v1657, 0.0
        %1661 = vadd.xlane.f32.xlu0 %v1660
        %v1662 = vpop.xlane.xlu0 %1661
        %v1663 = vsel %vm1261, %v1659, 0.0
        %1664 = vadd.xlane.f32.xlu0 %v1663
        %v1665 = vpop.xlane.xlu0 %1664
        %v1666 = vrcp.pop %v1662
        %v1667 = vrcp.pop %v1665
        %v1668 = vmul.f32 %v1657, %v1666
        %v1669 = vmul.f32 %v1659, %v1667
        %1670 = vrot.lane.b32.xlu0 %v1202, 32
        %v1671 = vpop.permute.xlu0 %1670
        %v1674 = vsel %vm1261, %v1668, 0
        %1676 = vmatpush.msra.mxu0 0.0
        %1677 = vmatpush.msra.mxu0 0.0
        %1678 = vmatpush.msra.mxu0 0.0
        %1679 = vmatpush.msra.mxu0 0.0
        %1680 = vmatpush.msra.mxu0 0.0
        %1681 = vmatpush.msra.mxu0 0.0
        %1682 = vmatpush.msra.mxu0 0.0
        %1683 = vmatpush.msra.mxu0 0.0
        %1684 = vmatpush.msra.mxu0 0.0
        %1685 = vmatpush.msra.mxu0 0.0
        %1686 = vmatpush.msra.mxu0 0.0
        %1687 = vmatpush.msra.mxu0 0.0
        %1688 = vmatpush.msra.mxu0 0.0
        %1689 = vmatpush.msra.mxu0 0.0
        %1690 = vmatpush.msra.mxu0 0.0
        %1691 = vmatpush.msra.mxu0 %v1671
        %1692 = vmatmul.f32.gmra.mxu0 %v1674
        %v1693 = vpop.f32.mrf.mxu0
        %v1694 = vadd.f32 0.0, %v1693
        %1695 = vdwg.mxu0
        %1696 = vrot.lane.b32.xlu0 %v1204, 32
        %v1697 = vpop.permute.xlu0 %1696
        %v1700 = vsel %vm1261, %v1669, 0
        %1702 = vmatpush.msra.mxu0 0.0
        %1703 = vmatpush.msra.mxu0 0.0
        %1704 = vmatpush.msra.mxu0 0.0
        %1705 = vmatpush.msra.mxu0 0.0
        %1706 = vmatpush.msra.mxu0 0.0
        %1707 = vmatpush.msra.mxu0 0.0
        %1708 = vmatpush.msra.mxu0 0.0
        %1709 = vmatpush.msra.mxu0 0.0
        %1710 = vmatpush.msra.mxu0 0.0
        %1711 = vmatpush.msra.mxu0 0.0
        %1712 = vmatpush.msra.mxu0 0.0
        %1713 = vmatpush.msra.mxu0 0.0
        %1714 = vmatpush.msra.mxu0 0.0
        %1715 = vmatpush.msra.mxu0 0.0
        %1716 = vmatpush.msra.mxu0 0.0
        %1717 = vmatpush.msra.mxu0 %v1697
        %1718 = vmatmul.f32.gmra.mxu0 %v1700
        %v1719 = vpop.f32.mrf.mxu0
        %v1720 = vadd.f32 0.0, %v1719
        %1721 = vdwg.mxu0
        %1724 = vrot.lane.b32.xlu0 %v1433, 32
        %v1725 = vpop.permute.xlu0 %1724
        %1726 = vrot.lane.b32.xlu0 %v1460, 32
        %v1727 = vpop.permute.xlu0 %1726
        %1732 = vrot.lane.b32.xlu0 %v1564, 64
        %v1733 = vpop.permute.xlu0 %1732
        %1734 = vrot.lane.b32.xlu0 %v1590, 64
        %v1735 = vpop.permute.xlu0 %1734
        %1740 = vrot.lane.b32.xlu0 %v1694, 96
        %v1741 = vpop.permute.xlu0 %1740
        %1742 = vrot.lane.b32.xlu0 %v1720, 96
        %v1743 = vpop.permute.xlu0 %1742
        %v1746 = vsel %vm1208, %v1305, %v1725
        %v1747 = vsel %vm1208, %v1328, %v1727
        %vm1748 = vcmask 523264
        %v1749 = vsel %vm1748, %v1746, %v1733
        %v1750 = vsel %vm1748, %v1747, %v1735
        %vm1751 = vcmask 785408
        %v1752 = vsel %vm1751, %v1749, %v1741
        %v1753 = vsel %vm1751, %v1750, %v1743
        %v1754 = vpack.c.bf16 %v1753, %v1752
        %v1755 = vld [vmem:[#allocation17] sm:$0xf]
        %v1756 = vld [vmem:[#allocation17 + $0x4] sm:$0xf]
        %v1757 = vld [vmem:[#allocation17 + $0x8] sm:$0xf]
        %v1758 = vld [vmem:[#allocation17 + $0xc] sm:$0xf]
        %v1759 = vld [vmem:[#allocation17 + $0x10] sm:$0xf]
        %v1760 = vld [vmem:[#allocation17 + $0x14] sm:$0xf]
        %v1761 = vld [vmem:[#allocation17 + $0x18] sm:$0xf]
        %v1762 = vld [vmem:[#allocation17 + $0x1c] sm:$0xf]
        %v1763 = vld [vmem:[#allocation17 + $0x20] sm:$0xf]
        %v1764 = vld [vmem:[#allocation17 + $0x24] sm:$0xf]
        %v1765 = vld [vmem:[#allocation17 + $0x28] sm:$0xf]
        %v1766 = vld [vmem:[#allocation17 + $0x2c] sm:$0xf]
        %v1767 = vld [vmem:[#allocation17 + $0x30] sm:$0xf]
        %v1768 = vld [vmem:[#allocation17 + $0x34] sm:$0xf]
        %v1769 = vld [vmem:[#allocation17 + $0x38] sm:$0xf]
        %v1770 = vld [vmem:[#allocation17 + $0x3c] sm:$0xf]
        %v1771 = vld [vmem:[%s11] sm:$0x1]
        %v1773 = vperm.slane %v1771, 0
        %v1791 = vunpack.c.l.b16 %v1755
        %v1792 = vunpack.c.l.b16 %v1756
        %v1793 = vunpack.c.l.b16 %v1757
        %v1794 = vunpack.c.l.b16 %v1758
        %v1795 = vunpack.c.l.b16 %v1759
        %v1796 = vunpack.c.l.b16 %v1760
        %v1797 = vunpack.c.l.b16 %v1761
        %v1798 = vunpack.c.l.b16 %v1762
        %v1799 = vunpack.c.l.b16 %v1763
        %v1800 = vunpack.c.l.b16 %v1764
        %v1801 = vunpack.c.l.b16 %v1765
        %v1802 = vunpack.c.l.b16 %v1766
        %v1803 = vunpack.c.l.b16 %v1767
        %v1804 = vunpack.c.l.b16 %v1768
        %v1805 = vunpack.c.l.b16 %v1769
        %v1806 = vunpack.c.l.b16 %v1770
        %v1807 = vpack.c.b16 %v1792, %v1791
        %v1808 = vpack.c.b16 %v1794, %v1793
        %v1809 = vpack.c.b16 %v1796, %v1795
        %v1810 = vpack.c.b16 %v1798, %v1797
        %v1811 = vpack.c.b16 %v1800, %v1799
        %v1812 = vpack.c.b16 %v1802, %v1801
        %v1813 = vpack.c.b16 %v1804, %v1803
        %v1814 = vpack.c.b16 %v1806, %v1805
        %1823 = vmatpush.bf16.msra.mxu0 %v1814
        %1824 = vmatpush.bf16.msra.mxu0 %v1813
        %1825 = vmatpush.bf16.msra.mxu0 %v1812
        %1826 = vmatpush.bf16.msra.mxu0 %v1811
        %1827 = vmatpush.bf16.msra.mxu0 %v1810
        %1828 = vmatpush.bf16.msra.mxu0 %v1809
        %1829 = vmatpush.bf16.msra.mxu0 %v1808
        %1830 = vmatpush.bf16.msra.mxu0 %v1807
        %1831 = vmatmul.bf16.gmra.mxu0 %v1754
        %v1832 = vpop.f32.mrf.mxu0
        %v1833 = vadd.f32 %v1773, %v1832
        %v1834 = vpop.f32.mrf.mxu0
        %v1835 = vadd.f32 %v1773, %v1834
        %1836 = vdwg.mxu0
        %v1837 = vadd.f32 %v741, %v1833
        %v1838 = vadd.f32 %v742, %v1835
        %v1839 = vld [vmem:[#allocation10] sm:$0x1]
        %v1840 = vld [vmem:[#allocation11] sm:$0x1]
        %1841 = vadd.xlane.f32.xlu0 %v1837
        %v1842 = vpop.xlane.xlu0 %1841
        %1843 = vadd.xlane.f32.xlu0 %v1838
        %v1844 = vpop.xlane.xlu0 %1843
        %v1845 = vmul.f32 %v1842, %v932
        %v1846 = vmul.f32 %v1844, %v932
        %v1847 = vsub.f32 %v1837, %v1845
        %v1848 = vsub.f32 %v1838, %v1846
        %v1849 = vmul.f32 %v1847, %v1847
        %v1850 = vmul.f32 %v1848, %v1848
        %1851 = vadd.xlane.f32.xlu0 %v1849
        %v1852 = vpop.xlane.xlu0 %1851
        %1853 = vadd.xlane.f32.xlu0 %v1850
        %v1854 = vpop.xlane.xlu0 %1853
        %v1855 = vmul.f32 %v1852, %v932
        %v1856 = vmul.f32 %v1854, %v932
        %v1857 = vadd.f32 %v1855, 1e-05
        %v1858 = vadd.f32 %v1856, 1e-05
        %v1859 = vrsqrt.pop %v1857
        %v1860 = vmul.f32 %v1859, %v1857
        %v1861 = vmul.f32 %v1860, %v1859
        %v1862 = vmul.f32 0.5, %v1861
        %v1863 = vsub.f32 1.5, %v1862
        %v1864 = vmul.f32 %v1859, %v1863
        %vm1865 = vweird.f32 %v1857
        %vm1866 = vweird.f32 %v1859
        %vm1867 = vmor %vm1865, %vm1866
        %v1868 = vsel %vm1867, %v1859, %v1864
        %v1869 = vrsqrt.pop %v1858
        %v1870 = vmul.f32 %v1869, %v1858
        %v1871 = vmul.f32 %v1870, %v1869
        %v1872 = vmul.f32 0.5, %v1871
        %v1873 = vsub.f32 1.5, %v1872
        %v1874 = vmul.f32 %v1869, %v1873
        %vm1875 = vweird.f32 %v1858
        %vm1876 = vweird.f32 %v1869
        %vm1877 = vmor %vm1875, %vm1876
        %v1878 = vsel %vm1877, %v1869, %v1874
        %v1879 = vmul.f32 %v1847, %v1868
        %v1880 = vmul.f32 %v1848, %v1878
        %v1882 = vperm.slane %v1839, 0
        %v1884 = vmul.f32 %v1879, %v1882
        %v1885 = vmul.f32 %v1880, %v1882
        %v1887 = vperm.slane %v1840, 0
        %v1889 = vadd.f32 %v1884, %v1887
        %v1890 = vadd.f32 %v1885, %v1887
        %v1891 = vadd.f32 %v914, 1.0
        %v1892 = vadd.f32 %v916, 1.0
        %v1895 = vperm.slane %v1891, 0
        %v1896 = vperm.slane %v1892, 0
        %v1899 = vmul.f32 %v1889, %v1895
        %v1900 = vmul.f32 %v1890, %v1896
        %v1901 = vperm.slane %v904, 0
        %v1902 = vperm.slane %v919, 0
        %v1905 = vadd.f32 %v1899, %v1901
        %v1906 = vadd.f32 %v1900, %v1902
        %v1907 = vpack.c.bf16 %v1906, %v1905
        %v1908 = vld [vmem:[#allocation19] sm:$0xff]
        %v1909 = vld [vmem:[#allocation19 + $0x8] sm:$0xff]
        %v1910 = vld [vmem:[#allocation19 + $0x10] sm:$0xff]
        %v1911 = vld [vmem:[#allocation19 + $0x18] sm:$0xff]
        %v1912 = vld [vmem:[#allocation19 + $0x20] sm:$0xff]
        %v1913 = vld [vmem:[#allocation19 + $0x28] sm:$0xff]
        %v1914 = vld [vmem:[#allocation19 + $0x30] sm:$0xff]
        %v1915 = vld [vmem:[#allocation19 + $0x38] sm:$0xff]
        %v1916 = vld [vmem:[#allocation19 + $0x40] sm:$0xff]
        %v1917 = vld [vmem:[#allocation19 + $0x48] sm:$0xff]
        %v1918 = vld [vmem:[#allocation19 + $0x50] sm:$0xff]
        %v1919 = vld [vmem:[#allocation19 + $0x58] sm:$0xff]
        %v1920 = vld [vmem:[#allocation19 + $0x60] sm:$0xff]
        %v1921 = vld [vmem:[#allocation19 + $0x68] sm:$0xff]
        %v1922 = vld [vmem:[#allocation19 + $0x70] sm:$0xff]
        %v1923 = vld [vmem:[#allocation19 + $0x78] sm:$0xff]
        %v1924 = vld [vmem:[#allocation19 + $0x80] sm:$0xff]
        %v1925 = vld [vmem:[#allocation19 + $0x88] sm:$0xff]
        %v1926 = vld [vmem:[#allocation19 + $0x90] sm:$0xff]
        %v1927 = vld [vmem:[#allocation19 + $0x98] sm:$0xff]
        %v1928 = vld [vmem:[#allocation19 + $0xa0] sm:$0xff]
        %v1929 = vld [vmem:[#allocation19 + $0xa8] sm:$0xff]
        %v1930 = vld [vmem:[#allocation19 + $0xb0] sm:$0xff]
        %v1931 = vld [vmem:[#allocation19 + $0xb8] sm:$0xff]
        %v1932 = vld [vmem:[#allocation19 + $0xc0] sm:$0xff]
        %v1933 = vld [vmem:[#allocation19 + $0xc8] sm:$0xff]
        %v1934 = vld [vmem:[#allocation19 + $0xd0] sm:$0xff]
        %v1935 = vld [vmem:[#allocation19 + $0xd8] sm:$0xff]
        %v1936 = vld [vmem:[#allocation19 + $0xe0] sm:$0xff]
        %v1937 = vld [vmem:[#allocation19 + $0xe8] sm:$0xff]
        %v1938 = vld [vmem:[#allocation19 + $0xf0] sm:$0xff]
        %v1939 = vld [vmem:[#allocation19 + $0xf8] sm:$0xff]
        %v1940 = vld [vmem:[%s13] sm:$0xf]
        %v1942 = vperm.slane %v1940, 0
        %v1943 = vperm.slane %v1940, 1
        %v1944 = vperm.slane %v1940, 2
        %v1945 = vperm.slane %v1940, 3
        %v1982 = vunpack.c.l.b16 %v1908
        %v1983 = vunpack.c.h.b16 %v1908
        %v1984 = vunpack.c.l.b16 %v1909
        %v1985 = vunpack.c.h.b16 %v1909
        %v1986 = vunpack.c.l.b16 %v1910
        %v1987 = vunpack.c.h.b16 %v1910
        %v1988 = vunpack.c.l.b16 %v1911
        %v1989 = vunpack.c.h.b16 %v1911
        %v1990 = vunpack.c.l.b16 %v1912
        %v1991 = vunpack.c.h.b16 %v1912
        %v1992 = vunpack.c.l.b16 %v1913
        %v1993 = vunpack.c.h.b16 %v1913
        %v1994 = vunpack.c.l.b16 %v1914
        %v1995 = vunpack.c.h.b16 %v1914
        %v1996 = vunpack.c.l.b16 %v1915
        %v1997 = vunpack.c.h.b16 %v1915
        %v1998 = vunpack.c.l.b16 %v1916
        %v1999 = vunpack.c.h.b16 %v1916
        %v2000 = vunpack.c.l.b16 %v1917
        %v2001 = vunpack.c.h.b16 %v1917
        %v2002 = vunpack.c.l.b16 %v1918
        %v2003 = vunpack.c.h.b16 %v1918
        %v2004 = vunpack.c.l.b16 %v1919
        %v2005 = vunpack.c.h.b16 %v1919
        %v2006 = vunpack.c.l.b16 %v1920
        %v2007 = vunpack.c.h.b16 %v1920
        %v2008 = vunpack.c.l.b16 %v1921
        %v2009 = vunpack.c.h.b16 %v1921
        %v2010 = vunpack.c.l.b16 %v1922
        %v2011 = vunpack.c.h.b16 %v1922
        %v2012 = vunpack.c.l.b16 %v1923
        %v2013 = vunpack.c.h.b16 %v1923
        %v2014 = vunpack.c.l.b16 %v1924
        %v2015 = vunpack.c.h.b16 %v1924
        %v2016 = vunpack.c.l.b16 %v1925
        %v2017 = vunpack.c.h.b16 %v1925
        %v2018 = vunpack.c.l.b16 %v1926
        %v2019 = vunpack.c.h.b16 %v1926
        %v2020 = vunpack.c.l.b16 %v1927
        %v2021 = vunpack.c.h.b16 %v1927
        %v2022 = vunpack.c.l.b16 %v1928
        %v2023 = vunpack.c.h.b16 %v1928
        %v2024 = vunpack.c.l.b16 %v1929
        %v2025 = vunpack.c.h.b16 %v1929
        %v2026 = vunpack.c.l.b16 %v1930
        %v2027 = vunpack.c.h.b16 %v1930
        %v2028 = vunpack.c.l.b16 %v1931
        %v2029 = vunpack.c.h.b16 %v1931
        %v2030 = vunpack.c.l.b16 %v1932
        %v2031 = vunpack.c.h.b16 %v1932
        %v2032 = vunpack.c.l.b16 %v1933
        %v2033 = vunpack.c.h.b16 %v1933
        %v2034 = vunpack.c.l.b16 %v1934
        %v2035 = vunpack.c.h.b16 %v1934
        %v2036 = vunpack.c.l.b16 %v1935
        %v2037 = vunpack.c.h.b16 %v1935
        %v2038 = vunpack.c.l.b16 %v1936
        %v2039 = vunpack.c.h.b16 %v1936
        %v2040 = vunpack.c.l.b16 %v1937
        %v2041 = vunpack.c.h.b16 %v1937
        %v2042 = vunpack.c.l.b16 %v1938
        %v2043 = vunpack.c.h.b16 %v1938
        %v2044 = vunpack.c.l.b16 %v1939
        %v2045 = vunpack.c.h.b16 %v1939
        %v2046 = vpack.c.b16 %v1986, %v1982
        %v2047 = vpack.c.b16 %v1987, %v1983
        %v2048 = vpack.c.b16 %v1988, %v1984
        %v2049 = vpack.c.b16 %v1989, %v1985
        %v2050 = vpack.c.b16 %v1994, %v1990
        %v2051 = vpack.c.b16 %v1995, %v1991
        %v2052 = vpack.c.b16 %v1996, %v1992
        %v2053 = vpack.c.b16 %v1997, %v1993
        %v2054 = vpack.c.b16 %v2002, %v1998
        %v2055 = vpack.c.b16 %v2003, %v1999
        %v2056 = vpack.c.b16 %v2004, %v2000
        %v2057 = vpack.c.b16 %v2005, %v2001
        %v2058 = vpack.c.b16 %v2010, %v2006
        %v2059 = vpack.c.b16 %v2011, %v2007
        %v2060 = vpack.c.b16 %v2012, %v2008
        %v2061 = vpack.c.b16 %v2013, %v2009
        %v2062 = vpack.c.b16 %v2018, %v2014
        %v2063 = vpack.c.b16 %v2019, %v2015
        %v2064 = vpack.c.b16 %v2020, %v2016
        %v2065 = vpack.c.b16 %v2021, %v2017
        %v2066 = vpack.c.b16 %v2026, %v2022
        %v2067 = vpack.c.b16 %v2027, %v2023
        %v2068 = vpack.c.b16 %v2028, %v2024
        %v2069 = vpack.c.b16 %v2029, %v2025
        %v2070 = vpack.c.b16 %v2034, %v2030
        %v2071 = vpack.c.b16 %v2035, %v2031
        %v2072 = vpack.c.b16 %v2036, %v2032
        %v2073 = vpack.c.b16 %v2037, %v2033
        %v2074 = vpack.c.b16 %v2042, %v2038
        %v2075 = vpack.c.b16 %v2043, %v2039
        %v2076 = vpack.c.b16 %v2044, %v2040
        %v2077 = vpack.c.b16 %v2045, %v2041
        %2110 = vmatpush.bf16.msra.mxu0 %v2074
        %2111 = vmatpush.bf16.msra.mxu0 %v2070
        %2112 = vmatpush.bf16.msra.mxu0 %v2066
        %2113 = vmatpush.bf16.msra.mxu0 %v2062
        %2114 = vmatpush.bf16.msra.mxu0 %v2058
        %2115 = vmatpush.bf16.msra.mxu0 %v2054
        %2116 = vmatpush.bf16.msra.mxu0 %v2050
        %2117 = vmatpush.bf16.msra.mxu0 %v2046
        %2118 = vmatmul.bf16.gmra.mxu0 %v1907
        %v2119 = vpop.f32.mrf.mxu0
        %v2120 = vadd.f32 %v1942, %v2119
        %v2121 = vpop.f32.mrf.mxu0
        %v2122 = vadd.f32 %v1942, %v2121
        %2123 = vdwg.mxu0
        %2124 = vmatpush.bf16.msra.mxu0 %v2075
        %2125 = vmatpush.bf16.msra.mxu0 %v2071
        %2126 = vmatpush.bf16.msra.mxu0 %v2067
        %2127 = vmatpush.bf16.msra.mxu0 %v2063
        %2128 = vmatpush.bf16.msra.mxu0 %v2059
        %2129 = vmatpush.bf16.msra.mxu0 %v2055
        %2130 = vmatpush.bf16.msra.mxu0 %v2051
        %2131 = vmatpush.bf16.msra.mxu0 %v2047
        %2132 = vmatmul.bf16.gmra.mxu0 %v1907
        %v2133 = vpop.f32.mrf.mxu0
        %v2134 = vadd.f32 %v1943, %v2133
        %v2135 = vpop.f32.mrf.mxu0
        %v2136 = vadd.f32 %v1943, %v2135
        %2137 = vdwg.mxu0
        %2138 = vmatpush.bf16.msra.mxu0 %v2076
        %2139 = vmatpush.bf16.msra.mxu0 %v2072
        %2140 = vmatpush.bf16.msra.mxu0 %v2068
        %2141 = vmatpush.bf16.msra.mxu0 %v2064
        %2142 = vmatpush.bf16.msra.mxu0 %v2060
        %2143 = vmatpush.bf16.msra.mxu0 %v2056
        %2144 = vmatpush.bf16.msra.mxu0 %v2052
        %2145 = vmatpush.bf16.msra.mxu0 %v2048
        %2146 = vmatmul.bf16.gmra.mxu0 %v1907
        %v2147 = vpop.f32.mrf.mxu0
        %v2148 = vadd.f32 %v1944, %v2147
        %v2149 = vpop.f32.mrf.mxu0
        %v2150 = vadd.f32 %v1944, %v2149
        %2151 = vdwg.mxu0
        %2152 = vmatpush.bf16.msra.mxu0 %v2077
        %2153 = vmatpush.bf16.msra.mxu0 %v2073
        %2154 = vmatpush.bf16.msra.mxu0 %v2069
        %2155 = vmatpush.bf16.msra.mxu0 %v2065
        %2156 = vmatpush.bf16.msra.mxu0 %v2061
        %2157 = vmatpush.bf16.msra.mxu0 %v2057
        %2158 = vmatpush.bf16.msra.mxu0 %v2053
        %2159 = vmatpush.bf16.msra.mxu0 %v2049
        %2160 = vmatmul.bf16.gmra.mxu0 %v1907
        %v2161 = vpop.f32.mrf.mxu0
        %v2162 = vadd.f32 %v1945, %v2161
        %v2163 = vpop.f32.mrf.mxu0
        %v2164 = vadd.f32 %v1945, %v2163
        %2165 = vdwg.mxu0
        %v2166 = vmul.f32 %v2120, %v2120
        %v2167 = vmul.f32 %v2134, %v2134
        %v2168 = vmul.f32 %v2148, %v2148
        %v2169 = vmul.f32 %v2162, %v2162
        %v2170 = vmul.f32 %v2122, %v2122
        %v2171 = vmul.f32 %v2136, %v2136
        %v2172 = vmul.f32 %v2150, %v2150
        %v2173 = vmul.f32 %v2164, %v2164
        %v2174 = vmul.f32 %v2120, %v2166
        %v2175 = vmul.f32 %v2134, %v2167
        %v2176 = vmul.f32 %v2148, %v2168
        %v2177 = vmul.f32 %v2162, %v2169
        %v2178 = vmul.f32 %v2122, %v2170
        %v2179 = vmul.f32 %v2136, %v2171
        %v2180 = vmul.f32 %v2150, %v2172
        %v2181 = vmul.f32 %v2164, %v2173
        %v2182 = vmul.f32 %v2174, 0.044715
        %v2183 = vmul.f32 %v2175, 0.044715
        %v2184 = vmul.f32 %v2176, 0.044715
        %v2185 = vmul.f32 %v2177, 0.044715
        %v2186 = vmul.f32 %v2178, 0.044715
        %v2187 = vmul.f32 %v2179, 0.044715
        %v2188 = vmul.f32 %v2180, 0.044715
        %v2189 = vmul.f32 %v2181, 0.044715
        %v2190 = vadd.f32 %v2120, %v2182
        %v2191 = vadd.f32 %v2134, %v2183
        %v2192 = vadd.f32 %v2148, %v2184
        %v2193 = vadd.f32 %v2162, %v2185
        %v2194 = vadd.f32 %v2122, %v2186
        %v2195 = vadd.f32 %v2136, %v2187
        %v2196 = vadd.f32 %v2150, %v2188
        %v2197 = vadd.f32 %v2164, %v2189
        %v2198 = vmul.f32 %v2190, 0.7978846
        %v2199 = vmul.f32 %v2191, 0.7978846
        %v2200 = vmul.f32 %v2192, 0.7978846
        %v2201 = vmul.f32 %v2193, 0.7978846
        %v2202 = vmul.f32 %v2194, 0.7978846
        %v2203 = vmul.f32 %v2195, 0.7978846
        %v2204 = vmul.f32 %v2196, 0.7978846
        %v2205 = vmul.f32 %v2197, 0.7978846
        %v2206 = vtanh.pop %v2198
        %v2207 = vtanh.pop %v2199
        %v2208 = vtanh.pop %v2200
        %v2209 = vtanh.pop %v2201
        %v2210 = vtanh.pop %v2202
        %v2211 = vtanh.pop %v2203
        %v2212 = vtanh.pop %v2204
        %v2213 = vtanh.pop %v2205
        %v2214 = vadd.f32 %v2206, 1.0
        %v2215 = vadd.f32 %v2207, 1.0
        %v2216 = vadd.f32 %v2208, 1.0
        %v2217 = vadd.f32 %v2209, 1.0
        %v2218 = vadd.f32 %v2210, 1.0
        %v2219 = vadd.f32 %v2211, 1.0
        %v2220 = vadd.f32 %v2212, 1.0
        %v2221 = vadd.f32 %v2213, 1.0
        %v2222 = vmul.f32 %v2214, 0.5
        %v2223 = vmul.f32 %v2215, 0.5
        %v2224 = vmul.f32 %v2216, 0.5
        %v2225 = vmul.f32 %v2217, 0.5
        %v2226 = vmul.f32 %v2218, 0.5
        %v2227 = vmul.f32 %v2219, 0.5
        %v2228 = vmul.f32 %v2220, 0.5
        %v2229 = vmul.f32 %v2221, 0.5
        %v2230 = vmul.f32 %v2120, %v2222
        %v2231 = vmul.f32 %v2134, %v2223
        %v2232 = vmul.f32 %v2148, %v2224
        %v2233 = vmul.f32 %v2162, %v2225
        %v2234 = vmul.f32 %v2122, %v2226
        %v2235 = vmul.f32 %v2136, %v2227
        %v2236 = vmul.f32 %v2150, %v2228
        %v2237 = vmul.f32 %v2164, %v2229
        %v2238 = vpack.c.bf16 %v2234, %v2230
        %v2239 = vpack.c.bf16 %v2235, %v2231
        %v2240 = vpack.c.bf16 %v2236, %v2232
        %v2241 = vpack.c.bf16 %v2237, %v2233
        %v2242 = vld [vmem:[#allocation20] sm:$0xf]
        %v2243 = vld [vmem:[#allocation20 + $0x4] sm:$0xf]
        %v2244 = vld [vmem:[#allocation20 + $0x8] sm:$0xf]
        %v2245 = vld [vmem:[#allocation20 + $0xc] sm:$0xf]
        %v2246 = vld [vmem:[#allocation20 + $0x10] sm:$0xf]
        %v2247 = vld [vmem:[#allocation20 + $0x14] sm:$0xf]
        %v2248 = vld [vmem:[#allocation20 + $0x18] sm:$0xf]
        %v2249 = vld [vmem:[#allocation20 + $0x1c] sm:$0xf]
        %v2250 = vld [vmem:[#allocation20 + $0x20] sm:$0xf]
        %v2251 = vld [vmem:[#allocation20 + $0x24] sm:$0xf]
        %v2252 = vld [vmem:[#allocation20 + $0x28] sm:$0xf]
        %v2253 = vld [vmem:[#allocation20 + $0x2c] sm:$0xf]
        %v2254 = vld [vmem:[#allocation20 + $0x30] sm:$0xf]
        %v2255 = vld [vmem:[#allocation20 + $0x34] sm:$0xf]
        %v2256 = vld [vmem:[#allocation20 + $0x38] sm:$0xf]
        %v2257 = vld [vmem:[#allocation20 + $0x3c] sm:$0xf]
        %v2258 = vld [vmem:[#allocation20 + $0x40] sm:$0xf]
        %v2259 = vld [vmem:[#allocation20 + $0x44] sm:$0xf]
        %v2260 = vld [vmem:[#allocation20 + $0x48] sm:$0xf]
        %v2261 = vld [vmem:[#allocation20 + $0x4c] sm:$0xf]
        %v2262 = vld [vmem:[#allocation20 + $0x50] sm:$0xf]
        %v2263 = vld [vmem:[#allocation20 + $0x54] sm:$0xf]
        %v2264 = vld [vmem:[#allocation20 + $0x58] sm:$0xf]
        %v2265 = vld [vmem:[#allocation20 + $0x5c] sm:$0xf]
        %v2266 = vld [vmem:[#allocation20 + $0x60] sm:$0xf]
        %v2267 = vld [vmem:[#allocation20 + $0x64] sm:$0xf]
        %v2268 = vld [vmem:[#allocation20 + $0x68] sm:$0xf]
        %v2269 = vld [vmem:[#allocation20 + $0x6c] sm:$0xf]
        %v2270 = vld [vmem:[#allocation20 + $0x70] sm:$0xf]
        %v2271 = vld [vmem:[#allocation20 + $0x74] sm:$0xf]
        %v2272 = vld [vmem:[#allocation20 + $0x78] sm:$0xf]
        %v2273 = vld [vmem:[#allocation20 + $0x7c] sm:$0xf]
        %v2274 = vld [vmem:[#allocation20 + $0x80] sm:$0xf]
        %v2275 = vld [vmem:[#allocation20 + $0x84] sm:$0xf]
        %v2276 = vld [vmem:[#allocation20 + $0x88] sm:$0xf]
        %v2277 = vld [vmem:[#allocation20 + $0x8c] sm:$0xf]
        %v2278 = vld [vmem:[#allocation20 + $0x90] sm:$0xf]
        %v2279 = vld [vmem:[#allocation20 + $0x94] sm:$0xf]
        %v2280 = vld [vmem:[#allocation20 + $0x98] sm:$0xf]
        %v2281 = vld [vmem:[#allocation20 + $0x9c] sm:$0xf]
        %v2282 = vld [vmem:[#allocation20 + $0xa0] sm:$0xf]
        %v2283 = vld [vmem:[#allocation20 + $0xa4] sm:$0xf]
        %v2284 = vld [vmem:[#allocation20 + $0xa8] sm:$0xf]
        %v2285 = vld [vmem:[#allocation20 + $0xac] sm:$0xf]
        %v2286 = vld [vmem:[#allocation20 + $0xb0] sm:$0xf]
        %v2287 = vld [vmem:[#allocation20 + $0xb4] sm:$0xf]
        %v2288 = vld [vmem:[#allocation20 + $0xb8] sm:$0xf]
        %v2289 = vld [vmem:[#allocation20 + $0xbc] sm:$0xf]
        %v2290 = vld [vmem:[#allocation20 + $0xc0] sm:$0xf]
        %v2291 = vld [vmem:[#allocation20 + $0xc4] sm:$0xf]
        %v2292 = vld [vmem:[#allocation20 + $0xc8] sm:$0xf]
        %v2293 = vld [vmem:[#allocation20 + $0xcc] sm:$0xf]
        %v2294 = vld [vmem:[#allocation20 + $0xd0] sm:$0xf]
        %v2295 = vld [vmem:[#allocation20 + $0xd4] sm:$0xf]
        %v2296 = vld [vmem:[#allocation20 + $0xd8] sm:$0xf]
        %v2297 = vld [vmem:[#allocation20 + $0xdc] sm:$0xf]
        %v2298 = vld [vmem:[#allocation20 + $0xe0] sm:$0xf]
        %v2299 = vld [vmem:[#allocation20 + $0xe4] sm:$0xf]
        %v2300 = vld [vmem:[#allocation20 + $0xe8] sm:$0xf]
        %v2301 = vld [vmem:[#allocation20 + $0xec] sm:$0xf]
        %v2302 = vld [vmem:[#allocation20 + $0xf0] sm:$0xf]
        %v2303 = vld [vmem:[#allocation20 + $0xf4] sm:$0xf]
        %v2304 = vld [vmem:[#allocation20 + $0xf8] sm:$0xf]
        %v2305 = vld [vmem:[#allocation20 + $0xfc] sm:$0xf]
        %v2306 = vld [vmem:[%s15] sm:$0x1]
        %v2308 = vperm.slane %v2306, 0
        %v2374 = vunpack.c.l.b16 %v2242
        %v2375 = vunpack.c.l.b16 %v2243
        %v2376 = vunpack.c.l.b16 %v2244
        %v2377 = vunpack.c.l.b16 %v2245
        %v2378 = vunpack.c.l.b16 %v2246
        %v2379 = vunpack.c.l.b16 %v2247
        %v2380 = vunpack.c.l.b16 %v2248
        %v2381 = vunpack.c.l.b16 %v2249
        %v2382 = vunpack.c.l.b16 %v2250
        %v2383 = vunpack.c.l.b16 %v2251
        %v2384 = vunpack.c.l.b16 %v2252
        %v2385 = vunpack.c.l.b16 %v2253
        %v2386 = vunpack.c.l.b16 %v2254
        %v2387 = vunpack.c.l.b16 %v2255
        %v2388 = vunpack.c.l.b16 %v2256
        %v2389 = vunpack.c.l.b16 %v2257
        %v2390 = vunpack.c.l.b16 %v2258
        %v2391 = vunpack.c.l.b16 %v2259
        %v2392 = vunpack.c.l.b16 %v2260
        %v2393 = vunpack.c.l.b16 %v2261
        %v2394 = vunpack.c.l.b16 %v2262
        %v2395 = vunpack.c.l.b16 %v2263
        %v2396 = vunpack.c.l.b16 %v2264
        %v2397 = vunpack.c.l.b16 %v2265
        %v2398 = vunpack.c.l.b16 %v2266
        %v2399 = vunpack.c.l.b16 %v2267
        %v2400 = vunpack.c.l.b16 %v2268
        %v2401 = vunpack.c.l.b16 %v2269
        %v2402 = vunpack.c.l.b16 %v2270
        %v2403 = vunpack.c.l.b16 %v2271
        %v2404 = vunpack.c.l.b16 %v2272
        %v2405 = vunpack.c.l.b16 %v2273
        %v2406 = vunpack.c.l.b16 %v2274
        %v2407 = vunpack.c.l.b16 %v2275
        %v2408 = vunpack.c.l.b16 %v2276
        %v2409 = vunpack.c.l.b16 %v2277
        %v2410 = vunpack.c.l.b16 %v2278
        %v2411 = vunpack.c.l.b16 %v2279
        %v2412 = vunpack.c.l.b16 %v2280
        %v2413 = vunpack.c.l.b16 %v2281
        %v2414 = vunpack.c.l.b16 %v2282
        %v2415 = vunpack.c.l.b16 %v2283
        %v2416 = vunpack.c.l.b16 %v2284
        %v2417 = vunpack.c.l.b16 %v2285
        %v2418 = vunpack.c.l.b16 %v2286
        %v2419 = vunpack.c.l.b16 %v2287
        %v2420 = vunpack.c.l.b16 %v2288
        %v2421 = vunpack.c.l.b16 %v2289
        %v2422 = vunpack.c.l.b16 %v2290
        %v2423 = vunpack.c.l.b16 %v2291
        %v2424 = vunpack.c.l.b16 %v2292
        %v2425 = vunpack.c.l.b16 %v2293
        %v2426 = vunpack.c.l.b16 %v2294
        %v2427 = vunpack.c.l.b16 %v2295
        %v2428 = vunpack.c.l.b16 %v2296
        %v2429 = vunpack.c.l.b16 %v2297
        %v2430 = vunpack.c.l.b16 %v2298
        %v2431 = vunpack.c.l.b16 %v2299
        %v2432 = vunpack.c.l.b16 %v2300
        %v2433 = vunpack.c.l.b16 %v2301
        %v2434 = vunpack.c.l.b16 %v2302
        %v2435 = vunpack.c.l.b16 %v2303
        %v2436 = vunpack.c.l.b16 %v2304
        %v2437 = vunpack.c.l.b16 %v2305
        %v2438 = vpack.c.b16 %v2375, %v2374
        %v2439 = vpack.c.b16 %v2377, %v2376
        %v2440 = vpack.c.b16 %v2379, %v2378
        %v2441 = vpack.c.b16 %v2381, %v2380
        %v2442 = vpack.c.b16 %v2383, %v2382
        %v2443 = vpack.c.b16 %v2385, %v2384
        %v2444 = vpack.c.b16 %v2387, %v2386
        %v2445 = vpack.c.b16 %v2389, %v2388
        %v2446 = vpack.c.b16 %v2391, %v2390
        %v2447 = vpack.c.b16 %v2393, %v2392
        %v2448 = vpack.c.b16 %v2395, %v2394
        %v2449 = vpack.c.b16 %v2397, %v2396
        %v2450 = vpack.c.b16 %v2399, %v2398
        %v2451 = vpack.c.b16 %v2401, %v2400
        %v2452 = vpack.c.b16 %v2403, %v2402
        %v2453 = vpack.c.b16 %v2405, %v2404
        %v2454 = vpack.c.b16 %v2407, %v2406
        %v2455 = vpack.c.b16 %v2409, %v2408
        %v2456 = vpack.c.b16 %v2411, %v2410
        %v2457 = vpack.c.b16 %v2413, %v2412
        %v2458 = vpack.c.b16 %v2415, %v2414
        %v2459 = vpack.c.b16 %v2417, %v2416
        %v2460 = vpack.c.b16 %v2419, %v2418
        %v2461 = vpack.c.b16 %v2421, %v2420
        %v2462 = vpack.c.b16 %v2423, %v2422
        %v2463 = vpack.c.b16 %v2425, %v2424
        %v2464 = vpack.c.b16 %v2427, %v2426
        %v2465 = vpack.c.b16 %v2429, %v2428
        %v2466 = vpack.c.b16 %v2431, %v2430
        %v2467 = vpack.c.b16 %v2433, %v2432
        %v2468 = vpack.c.b16 %v2435, %v2434
        %v2469 = vpack.c.b16 %v2437, %v2436
        %2502 = vmatpush.bf16.msra.mxu0 %v2445
        %2503 = vmatpush.bf16.msra.mxu0 %v2444
        %2504 = vmatpush.bf16.msra.mxu0 %v2443
        %2505 = vmatpush.bf16.msra.mxu0 %v2442
        %2506 = vmatpush.bf16.msra.mxu0 %v2441
        %2507 = vmatpush.bf16.msra.mxu0 %v2440
        %2508 = vmatpush.bf16.msra.mxu0 %v2439
        %2509 = vmatpush.bf16.msra.mxu0 %v2438
        %2510 = vmatmul.bf16.gmra.mxu0 %v2238
        %v2511 = vpop.f32.mrf.mxu0
        %v2512 = vadd.f32 %v2308, %v2511
        %v2513 = vpop.f32.mrf.mxu0
        %v2514 = vadd.f32 %v2308, %v2513
        %2515 = vdwg.mxu0
        %2516 = vmatpush.bf16.msra.mxu0 %v2453
        %2517 = vmatpush.bf16.msra.mxu0 %v2452
        %2518 = vmatpush.bf16.msra.mxu0 %v2451
        %2519 = vmatpush.bf16.msra.mxu0 %v2450
        %2520 = vmatpush.bf16.msra.mxu0 %v2449
        %2521 = vmatpush.bf16.msra.mxu0 %v2448
        %2522 = vmatpush.bf16.msra.mxu0 %v2447
        %2523 = vmatpush.bf16.msra.mxu0 %v2446
        %2524 = vmatmul.bf16.gmra.mxu0 %v2239
        %v2525 = vpop.f32.mrf.mxu0
        %v2526 = vadd.f32 %v2512, %v2525
        %v2527 = vpop.f32.mrf.mxu0
        %v2528 = vadd.f32 %v2514, %v2527
        %2529 = vdwg.mxu0
        %2530 = vmatpush.bf16.msra.mxu0 %v2461
        %2531 = vmatpush.bf16.msra.mxu0 %v2460
        %2532 = vmatpush.bf16.msra.mxu0 %v2459
        %2533 = vmatpush.bf16.msra.mxu0 %v2458
        %2534 = vmatpush.bf16.msra.mxu0 %v2457
        %2535 = vmatpush.bf16.msra.mxu0 %v2456
        %2536 = vmatpush.bf16.msra.mxu0 %v2455
        %2537 = vmatpush.bf16.msra.mxu0 %v2454
        %2538 = vmatmul.bf16.gmra.mxu0 %v2240
        %v2539 = vpop.f32.mrf.mxu0
        %v2540 = vadd.f32 %v2526, %v2539
        %v2541 = vpop.f32.mrf.mxu0
        %v2542 = vadd.f32 %v2528, %v2541
        %2543 = vdwg.mxu0
        %2544 = vmatpush.bf16.msra.mxu0 %v2469
        %2545 = vmatpush.bf16.msra.mxu0 %v2468
        %2546 = vmatpush.bf16.msra.mxu0 %v2467
        %2547 = vmatpush.bf16.msra.mxu0 %v2466
        %2548 = vmatpush.bf16.msra.mxu0 %v2465
        %2549 = vmatpush.bf16.msra.mxu0 %v2464
        %2550 = vmatpush.bf16.msra.mxu0 %v2463
        %2551 = vmatpush.bf16.msra.mxu0 %v2462
        %2552 = vmatmul.bf16.gmra.mxu0 %v2241
        %v2553 = vpop.f32.mrf.mxu0
        %v2554 = vadd.f32 %v2540, %v2553
        %v2555 = vpop.f32.mrf.mxu0
        %v2556 = vadd.f32 %v2542, %v2555
        %2557 = vdwg.mxu0
        %v2558 = vadd.f32 %v1837, %v2554
        %v2559 = vadd.f32 %v1838, %v2556
        %2560 = vst [vmem:[%s737] sm:$0xff] %v2558
        %2561 = vst [vmem:[%s737 + $0x8] sm:$0xff] %v2559
        %s2562 = sand.u32 %s395, 1
        %s2563 = scalar_lea.sflag [#allocation4], %s2562
        %s2564 = sand.u32 %s395, 1
        %s2565 = smul.addr %s2564, 16
        %s2566 = scalar_lea.vmem [#allocation22], %s2565
        // Predicated region
        $region133: #{tpu_custom_call.1} parent=83 // pred_check
          %p2567 = pneg %p405
        $region134: #{tpu_custom_call.1} parent=83 // pred_check_branch
          %2569 = sbr.rel (%p2567) target = $region136
        $region135: #{tpu_custom_call.1} parent=83 // pred_region
          %s2570 = smul.u32 2, %s41
          %2572 = vsyncadd %s2563, 0
          %s2573 = smul.addr %s2570, 8
          %s2574 = scalar_lea.hbm %s16, %s2573
          %s2575 = sshll.u32 %s2566, 4
          %s2576 = int_to_ptr.vmem [resolvable:$true] %s2575
          %s2577 = sshll.u32 %s2574, 4
          %s2578 = int_to_ptr.hbm [resolvable:$true] %s2577
          %2583 = dma.vmem_to_hbm [thread:$0]  %s2576, 256, %s2578, %s2563, 128, 128, 8
        $region136: #{tpu_custom_call.1} parent=83 // pred_fallthru
          _
      $region84: #{tpu_custom_call.1} parent=5 // pred_fallthru
        _
      %p2584 = scmp.le.s32.totalorder 2, %s36
      // Predicated region
      $region137: #{tpu_custom_call.1} parent=5 // pred_check
        %p2585 = pneg %p2584
      $region138: #{tpu_custom_call.1} parent=5 // pred_check_branch
        %2587 = sbr.rel (%p2585) target = $region140
      $region139: #{tpu_custom_call.1} parent=5 // pred_region
        %s2588 = ssub.s32 %s36, 2
        // Predicated region
        $region141: #{tpu_custom_call.1} parent=139 // pred_check
          %p2589 = pneg %p411
        $region142: #{tpu_custom_call.1} parent=139 // pred_check_branch
          %2591 = sbr.rel (%p2589) target = $region144
        $region143: #{tpu_custom_call.1} parent=139 // pred_region
          %s2592 = sand.u32 %s396, 1
          %s2593 = scalar_lea.sflag [#allocation4], %s2592
          %s2594 = sand.u32 %s396, 1
          %s2595 = smul.addr %s2594, 16
          %s2596 = scalar_lea.vmem [#allocation22], %s2595
          %2598 = dma.done %s2593, 256
        $region144: #{tpu_custom_call.1} parent=139 // pred_fallthru
          _
      $region140: #{tpu_custom_call.1} parent=5 // pred_fallthru
        _
    $region6: #{tpu_custom_call.1} parent=1 // loop_footer
      %s40 = sadd.s32 1, %s36
    $region7: #{tpu_custom_call.1} parent=1 // loop_footer_branch
      %35 = sbr.rel target = $region3
    $region8: #{tpu_custom_call.1} parent=1 // loop_exit
      _
    %2599 = vsyncpa [#allocation3], 1
    %s2600 = scalar_lea.sflag [#allocation3], 1
    %2601 = vsyncpa %s2600, 1
    %2602 = vsyncpa [#allocation6], 1
    %s2603 = scalar_lea.sflag [#allocation6], 1
    %2604 = vsyncpa %s2603, 1
    %2605 = vsyncpa [#allocation9], 1
    %2606 = vsyncpa [#allocation12], 1
    %2607 = vsyncpa [#allocation15], 1
    %2608 = vsyncpa [#allocation18], 1
    %2609 = vsyncpa [#allocation21], 1
    %2610 = vsyncpa [#allocation4], 1
    %s2611 = scalar_lea.sflag [#allocation4], 1
    %2612 = vsyncpa %s2611, 1

</llo_original>
